<compile_context>
chip_gen: v6e
topology: v6e:2x2x1
jax: 0.10.0
libtpu: 0.0.40
codegen_flags: <defaults>
</compile_context>

<pallas_src>
import functools

import jax
import jax.numpy as jnp
from jax import lax
from jax.experimental import pallas as pl
from jax.experimental.pallas import tpu as pltpu


def _cpr_kernel(x_ref, w1_ref, bn1_ref, dww_ref, mask_ref, bn2_ref,
                w3_ref, bn3_ref, o_ref, *, taps, use_res):
    """Fused CPR forward for one batch element.

    x_ref:    (1, Cin,  HW)   input, NCHW with H*W flattened into the lane dim
    w1_ref:   (Chid, Cin)     1x1 expand conv weight
    bn1_ref:  (Chid, 2)       folded BN1 (scale, shift), conv1 bias included
    dww_ref:  (Chid, T)       depthwise taps, T = 3 dilations * 9 taps
    mask_ref: (T,   HW)       zero-padding validity mask per tap (f32 0/1)
    bn2_ref:  (Chid, 2)       folded BN2 (scale, shift), summed dw biases included
    w3_ref:   (Cout, Chid)    1x1 project conv weight (no bias)
    bn3_ref:  (Cout, 2)       folded BN3 (scale, shift)
    o_ref:    (1, Cout, HW)   output
    taps:     static tuple of lane-roll amounts per tap
    use_res:  static bool, add residual x
    """
    x = x_ref[0]                                               # (Cin, HW)

    # --- stage 1: 1x1 expand conv + BN + ReLU (MXU) ----------------------
    bn1 = bn1_ref[...]
    m = jnp.dot(w1_ref[...], x, preferred_element_type=jnp.float32)
    m = jnp.maximum(m * bn1[:, 0:1] + bn1[:, 1:2], 0.0)        # (Chid, HW)

    # --- stage 2: sum of 3 dilated depthwise 3x3 convs + BN + ReLU -------
    # out[c, p] = sum_t w[c, t] * mask_t[p] * m[c, p + shift_t]   (zero padding)
    dww = dww_ref[...]
    acc = jnp.zeros_like(m)
    for t, shift in enumerate(taps):
        shifted = m if shift == 0 else pltpu.roll(m, shift, axis=1)
        acc = acc + dww[:, t:t + 1] * (mask_ref[t:t + 1, :] * shifted)
    bn2 = bn2_ref[...]
    m2 = jnp.maximum(acc * bn2[:, 0:1] + bn2[:, 1:2], 0.0)     # (Chid, HW)

    # --- stage 3: 1x1 project conv + BN (+ residual) (MXU) ---------------
    bn3 = bn3_ref[...]
    y = jnp.dot(w3_ref[...], m2, preferred_element_type=jnp.float32)
    y = y * bn3[:, 0:1] + bn3[:, 1:2]                          # (Cout, HW)
    if use_res:
        y = y + x
    o_ref[0] = y.astype(o_ref.dtype)


def _fold_bn(gamma, beta, mean, var, conv_bias, eps):
    scale = gamma / jnp.sqrt(var + eps)
    shift = (conv_bias - mean) * scale + beta
    return jnp.stack([scale, shift], axis=1).astype(jnp.float32)    # (C, 2)


def cpr_forward(x, p, *, dilations=(1, 2, 3), eps=1e-5, stride=1, residual=True):
    """CPR forward pass (inference-mode BN).  x: (N, Cin, H, W) float32, NCHW."""
    assert stride in (1, 2) and len(dilations) == 3
    n, cin, h, w = x.shape
    hidden = p["w1"].shape[0]
    cout = p["w3"].shape[0]
    hw = h * w
    # NB: in the PyTorch module `stride` only gates the residual connection.
    use_res = bool(residual) and stride == 1 and cin == cout

    # --- fold parameters (tiny; constant-folded under jit) ---------------
    w1 = p["w1"].reshape(hidden, cin).astype(jnp.float32)
    bn1 = _fold_bn(p["g1"], p["b1"], p["m1"], p["v1"], p["conv1_b"], eps)

    dww = jnp.concatenate([p["dw1"].reshape(hidden, 9),
                           p["dw2"].reshape(hidden, 9),
                           p["dw3"].reshape(hidden, 9)],
                          axis=1).astype(jnp.float32)               # (Chid, 27)
    dw_bias_sum = p["dw1_b"] + p["dw2_b"] + p["dw3_b"]
    bn2 = _fold_bn(p["g2"], p["b2"], p["m2"], p["v2"], dw_bias_sum, eps)

    w3 = p["w3"].reshape(cout, hidden).astype(jnp.float32)
    bn3 = _fold_bn(p["g3"], p["b3"], p["m3"], p["v3"],
                   jnp.zeros((cout,), jnp.float32), eps)

    # Static lane-roll amounts + zero-padding masks for the 27 depthwise taps.
    taps = []
    masks = []
    rows = jnp.arange(h).reshape(h, 1)
    cols = jnp.arange(w).reshape(1, w)
    for d in dilations:
        for ki in range(3):
            for kj in range(3):
                dh, dw = (ki - 1) * d, (kj - 1) * d
                taps.append((-(dh * w + dw)) % hw)
                valid = ((rows + dh >= 0) & (rows + dh < h) &
                         (cols + dw >= 0) & (cols + dw < w))
                masks.append(valid.reshape(hw))
    ntaps = len(taps)
    mask_arr = jnp.stack(masks, axis=0).astype(jnp.float32)         # (T, HW)

    x_flat = x.reshape(n, cin, hw).astype(jnp.float32)

    kernel = functools.partial(_cpr_kernel, taps=tuple(taps), use_res=use_res)

    # TODO(synk): at production sizes, cast activations/weights to bf16 for the MXU
    # and tile H*W / set vmem_limit_bytes if the (C, H*W) blocks outgrow VMEM (v7x: 64 MiB).
    out = pl.pallas_call(
        kernel,
        out_shape=jax.ShapeDtypeStruct((n, cout, hw), jnp.float32),
        grid=(n,),
        in_specs=[
            pl.BlockSpec((1, cin, hw), lambda i: (i, 0, 0)),        # x
            pl.BlockSpec((hidden, cin), lambda i: (0, 0)),          # w1
            pl.BlockSpec((hidden, 2), lambda i: (0, 0)),            # bn1 (scale, shift)
            pl.BlockSpec((hidden, ntaps), lambda i: (0, 0)),        # depthwise taps
            pl.BlockSpec((ntaps, hw), lambda i: (0, 0)),            # tap padding masks
            pl.BlockSpec((hidden, 2), lambda i: (0, 0)),            # bn2 (scale, shift)
            pl.BlockSpec((cout, hidden), lambda i: (0, 0)),         # w3
            pl.BlockSpec((cout, 2), lambda i: (0, 0)),              # bn3 (scale, shift)
        ],
        out_specs=pl.BlockSpec((1, cout, hw), lambda i: (i, 0, 0)),
        compiler_params=pltpu.CompilerParams(
            dimension_semantics=("parallel",)),
    )(x_flat, w1, bn1, dww, mask_arr, bn2, w3, bn3)

    return out.reshape(n, cout, h, w)


def _reference(x, p, *, dilations, eps, stride, residual):
    """Pure-JAX reference mirroring the PyTorch CPR forward (inference BN)."""
    prec = lax.Precision.HIGHEST

    def bn(y, g, b, m, v):
        rs = lambda t: t.reshape(1, -1, 1, 1)
        return (y - rs(m)) / jnp.sqrt(rs(v) + eps) * rs(g) + rs(b)

    m = lax.conv_general_dilated(
        x, p["w1"], (1, 1), [(0, 0), (0, 0)],
        dimension_numbers=("NCHW", "OIHW", "NCHW"), precision=prec)
    m = m + p["conv1_b"].reshape(1, -1, 1, 1)
    m = jnp.maximum(bn(m, p["g1"], p["b1"], p["m1"], p["v1"]), 0.0)

    hidden = m.shape[1]
    dsum = jnp.zeros_like(m)
    for wname, bname, d in (("dw1", "dw1_b", dilations[0]),
                            ("dw2", "dw2_b", dilations[1]),
                            ("dw3", "dw3_b", dilations[2])):
        y = lax.conv_general_dilated(
            m, p[wname], (1, 1), [(d, d), (d, d)], rhs_dilation=(d, d),
            feature_group_count=hidden,
            dimension_numbers=("NCHW", "OIHW", "NCHW"), precision=prec)
        dsum = dsum + y + p[bname].reshape(1, -1, 1, 1)
    m = jnp.maximum(bn(dsum, p["g2"], p["b2"], p["m2"], p["v2"]), 0.0)

    y = lax.conv_general_dilated(
        m, p["w3"], (1, 1), [(0, 0), (0, 0)],
        dimension_numbers=("NCHW", "OIHW", "NCHW"), precision=prec)
    y = bn(y, p["g3"], p["b3"], p["m3"], p["v3"])
    if residual and stride == 1 and x.shape[1] == y.shape[1]:
        y = x + y
    return y


if __name__ == "__main__":
    # CPR(inp=4, oup=4, stride=1, expand_ratio=4, dilation=[1,2,3], residual=True)
    N, INP, OUP, H, W = 2, 4, 4, 16, 16
    EXPAND = 4
    HIDDEN = int(round(INP * EXPAND))      # 16
    DIL = (1, 2, 3)
    EPS = 1e-5                             # BatchNorm2d default

    keys = iter(jax.random.split(jax.random.PRNGKey(0), 32))

    def rnd(shape, s=1.0):
        return s * jax.random.normal(next(keys), shape, jnp.float32)

    x = rnd((N, INP, H, W))
    params = {
        # conv1 (1x1, bias) + BN1
        "w1": rnd((HIDDEN, INP, 1, 1), 0.3), "conv1_b": rnd((HIDDEN,), 0.1),
        "g1": 1.0 + rnd((HIDDEN,), 0.1), "b1": rnd((HIDDEN,), 0.1),
        "m1": rnd((HIDDEN,), 0.1),
        "v1": 0.5 + jax.random.uniform(next(keys), (HIDDEN,), jnp.float32),
        # three dilated depthwise 3x3 convs (bias) + BN2
        "dw1": rnd((HIDDEN, 1, 3, 3), 0.2), "dw1_b": rnd((HIDDEN,), 0.1),
        "dw2": rnd((HIDDEN, 1, 3, 3), 0.2), "dw2_b": rnd((HIDDEN,), 0.1),
        "dw3": rnd((HIDDEN, 1, 3, 3), 0.2), "dw3_b": rnd((HIDDEN,), 0.1),
        "g2": 1.0 + rnd((HIDDEN,), 0.1), "b2": rnd((HIDDEN,), 0.1),
        "m2": rnd((HIDDEN,), 0.1),
        "v2": 0.5 + jax.random.uniform(next(keys), (HIDDEN,), jnp.float32),
        # out_conv (1x1, no bias) + BN3
        "w3": rnd((OUP, HIDDEN, 1, 1), 0.2),
        "g3": 1.0 + rnd((OUP,), 0.1), "b3": rnd((OUP,), 0.1),
        "m3": rnd((OUP,), 0.1),
        "v3": 0.5 + jax.random.uniform(next(keys), (OUP,), jnp.float32),
    }

    fwd = jax.jit(functools.partial(cpr_forward, dilations=DIL, eps=EPS,
                                    stride=1, residual=True))
    out = jax.block_until_ready(fwd(x, params))

    ref = _reference(x, params, dilations=DIL, eps=EPS, stride=1, residual=True)
    assert out.shape == (N, OUP, H, W), out.shape
    err = float(jnp.max(jnp.abs(out - ref)))
    assert err < 1e-3, f"mismatch vs reference: max abs err = {err}"

    print("KERNEL_OK")
</pallas_src>

<mosaic_0001>
module attributes {stable_mosaic.version = 11 : i64} {
  func.func @_cpr_kernel(%arg0: i32, %arg1: memref<1x4x256xf32, #tpu.memory_space<vmem>>, %arg2: memref<16x4xf32, #tpu.memory_space<vmem>>, %arg3: memref<16x2xf32, #tpu.memory_space<vmem>>, %arg4: memref<16x27xf32, #tpu.memory_space<vmem>>, %arg5: memref<27x256xf32, #tpu.memory_space<vmem>>, %arg6: memref<16x2xf32, #tpu.memory_space<vmem>>, %arg7: memref<4x16xf32, #tpu.memory_space<vmem>>, %arg8: memref<4x2xf32, #tpu.memory_space<vmem>>, %arg9: memref<1x4x256xf32, #tpu.memory_space<vmem>>) attributes {dimension_semantics = [#tpu.dimension_semantics<parallel>], iteration_bounds = array<i64: 2>, scalar_prefetch = 0 : i64, scratch_operands = 0 : i64, tpu.core_type = #tpu.core_type<tc>, window_params = [{transform_indices = @transform_0, window_bounds = array<i64: 1, 4, 256>}, {pipeline_mode = #tpu.pipeline_mode<synchronous>, transform_indices = @transform_1, window_bounds = array<i64: 16, 4>}, {pipeline_mode = #tpu.pipeline_mode<synchronous>, transform_indices = @transform_2, window_bounds = array<i64: 16, 2>}, {pipeline_mode = #tpu.pipeline_mode<synchronous>, transform_indices = @transform_3, window_bounds = array<i64: 16, 27>}, {pipeline_mode = #tpu.pipeline_mode<synchronous>, transform_indices = @transform_4, window_bounds = array<i64: 27, 256>}, {pipeline_mode = #tpu.pipeline_mode<synchronous>, transform_indices = @transform_5, window_bounds = array<i64: 16, 2>}, {pipeline_mode = #tpu.pipeline_mode<synchronous>, transform_indices = @transform_6, window_bounds = array<i64: 4, 16>}, {pipeline_mode = #tpu.pipeline_mode<synchronous>, transform_indices = @transform_7, window_bounds = array<i64: 4, 2>}, {transform_indices = @transform_8, window_bounds = array<i64: 1, 4, 256>}]} {
    %c0 = arith.constant 0 : index
    %c0_0 = arith.constant 0 : index
    %c0_1 = arith.constant 0 : index
    %0 = vector.load %arg1[%c0, %c0_0, %c0_1] : memref<1x4x256xf32, #tpu.memory_space<vmem>>, vector<1x4x256xf32>
    %1 = vector.shape_cast %0 : vector<1x4x256xf32> to vector<4x256xf32>
    %c0_2 = arith.constant 0 : index
    %c0_3 = arith.constant 0 : index
    %2 = vector.load %arg3[%c0_2, %c0_3] : memref<16x2xf32, #tpu.memory_space<vmem>>, vector<16x2xf32>
    %c0_4 = arith.constant 0 : index
    %c0_5 = arith.constant 0 : index
    %3 = vector.load %arg2[%c0_4, %c0_5] : memref<16x4xf32, #tpu.memory_space<vmem>>, vector<16x4xf32>
    %cst = arith.constant dense<0.000000e+00> : vector<16x256xf32>
    %4 = tpu.matmul %3, %1, %cst {dimension_numbers = #tpu.dot_dimension_numbers<[1], [0], [0], [1], [0, 0, 1, 1], [], []>} : vector<16x4xf32>, vector<4x256xf32>, vector<16x256xf32> -> vector<16x256xf32>
    %5 = vector.extract_strided_slice %2 {offsets = [0, 0], sizes = [16, 1], strides = [1, 1]} : vector<16x2xf32> to vector<16x1xf32>
    %6 = vector.broadcast %5 : vector<16x1xf32> to vector<16x256xf32>
    %7 = arith.mulf %4, %6 : vector<16x256xf32>
    %8 = vector.extract_strided_slice %2 {offsets = [0, 1], sizes = [16, 1], strides = [1, 1]} : vector<16x2xf32> to vector<16x1xf32>
    %9 = vector.broadcast %8 : vector<16x1xf32> to vector<16x256xf32>
    %10 = arith.addf %7, %9 : vector<16x256xf32>
    %cst_6 = arith.constant 0.000000e+00 : f32
    %11 = vector.broadcast %cst_6 : f32 to vector<16x256xf32>
    %12 = arith.maximumf %10, %11 : vector<16x256xf32>
    %c0_7 = arith.constant 0 : index
    %c0_8 = arith.constant 0 : index
    %13 = vector.load %arg4[%c0_7, %c0_8] : memref<16x27xf32, #tpu.memory_space<vmem>>, vector<16x27xf32>
    %cst_9 = arith.constant 0.000000e+00 : f32
    %14 = vector.broadcast %cst_9 : f32 to vector<16x256xf32>
    %c17_i32 = arith.constant 17 : i32
    %15 = tpu.dynamic_rotate %12 by %c17_i32 dim 1 : vector<16x256xf32>, i32 -> vector<16x256xf32>
    %16 = vector.extract_strided_slice %13 {offsets = [0, 0], sizes = [16, 1], strides = [1, 1]} : vector<16x27xf32> to vector<16x1xf32>
    %c0_10 = arith.constant 0 : index
    %c0_11 = arith.constant 0 : index
    %17 = vector.load %arg5[%c0_10, %c0_11] : memref<27x256xf32, #tpu.memory_space<vmem>>, vector<1x256xf32>
    %18 = vector.broadcast %17 : vector<1x256xf32> to vector<16x256xf32>
    %19 = arith.mulf %18, %15 : vector<16x256xf32>
    %20 = vector.broadcast %16 : vector<16x1xf32> to vector<16x256xf32>
    %21 = arith.mulf %20, %19 : vector<16x256xf32>
    %22 = arith.addf %14, %21 : vector<16x256xf32>
    %c16_i32 = arith.constant 16 : i32
    %23 = tpu.dynamic_rotate %12 by %c16_i32 dim 1 : vector<16x256xf32>, i32 -> vector<16x256xf32>
    %24 = vector.extract_strided_slice %13 {offsets = [0, 1], sizes = [16, 1], strides = [1, 1]} : vector<16x27xf32> to vector<16x1xf32>
    %c1 = arith.constant 1 : index
    %c0_12 = arith.constant 0 : index
    %25 = vector.load %arg5[%c1, %c0_12] : memref<27x256xf32, #tpu.memory_space<vmem>>, vector<1x256xf32>
    %26 = vector.broadcast %25 : vector<1x256xf32> to vector<16x256xf32>
    %27 = arith.mulf %26, %23 : vector<16x256xf32>
    %28 = vector.broadcast %24 : vector<16x1xf32> to vector<16x256xf32>
    %29 = arith.mulf %28, %27 : vector<16x256xf32>
    %30 = arith.addf %22, %29 : vector<16x256xf32>
    %c15_i32 = arith.constant 15 : i32
    %31 = tpu.dynamic_rotate %12 by %c15_i32 dim 1 : vector<16x256xf32>, i32 -> vector<16x256xf32>
    %32 = vector.extract_strided_slice %13 {offsets = [0, 2], sizes = [16, 1], strides = [1, 1]} : vector<16x27xf32> to vector<16x1xf32>
    %c2 = arith.constant 2 : index
    %c0_13 = arith.constant 0 : index
    %33 = vector.load %arg5[%c2, %c0_13] : memref<27x256xf32, #tpu.memory_space<vmem>>, vector<1x256xf32>
    %34 = vector.broadcast %33 : vector<1x256xf32> to vector<16x256xf32>
    %35 = arith.mulf %34, %31 : vector<16x256xf32>
    %36 = vector.broadcast %32 : vector<16x1xf32> to vector<16x256xf32>
    %37 = arith.mulf %36, %35 : vector<16x256xf32>
    %38 = arith.addf %30, %37 : vector<16x256xf32>
    %c1_i32 = arith.constant 1 : i32
    %39 = tpu.dynamic_rotate %12 by %c1_i32 dim 1 : vector<16x256xf32>, i32 -> vector<16x256xf32>
    %40 = vector.extract_strided_slice %13 {offsets = [0, 3], sizes = [16, 1], strides = [1, 1]} : vector<16x27xf32> to vector<16x1xf32>
    %c3 = arith.constant 3 : index
    %c0_14 = arith.constant 0 : index
    %41 = vector.load %arg5[%c3, %c0_14] : memref<27x256xf32, #tpu.memory_space<vmem>>, vector<1x256xf32>
    %42 = vector.broadcast %41 : vector<1x256xf32> to vector<16x256xf32>
    %43 = arith.mulf %42, %39 : vector<16x256xf32>
    %44 = vector.broadcast %40 : vector<16x1xf32> to vector<16x256xf32>
    %45 = arith.mulf %44, %43 : vector<16x256xf32>
    %46 = arith.addf %38, %45 : vector<16x256xf32>
    %47 = vector.extract_strided_slice %13 {offsets = [0, 4], sizes = [16, 1], strides = [1, 1]} : vector<16x27xf32> to vector<16x1xf32>
    %c4 = arith.constant 4 : index
    %c0_15 = arith.constant 0 : index
    %48 = vector.load %arg5[%c4, %c0_15] : memref<27x256xf32, #tpu.memory_space<vmem>>, vector<1x256xf32>
    %49 = vector.broadcast %48 : vector<1x256xf32> to vector<16x256xf32>
    %50 = arith.mulf %49, %12 : vector<16x256xf32>
    %51 = vector.broadcast %47 : vector<16x1xf32> to vector<16x256xf32>
    %52 = arith.mulf %51, %50 : vector<16x256xf32>
    %53 = arith.addf %46, %52 : vector<16x256xf32>
    %c255_i32 = arith.constant 255 : i32
    %54 = tpu.dynamic_rotate %12 by %c255_i32 dim 1 : vector<16x256xf32>, i32 -> vector<16x256xf32>
    %55 = vector.extract_strided_slice %13 {offsets = [0, 5], sizes = [16, 1], strides = [1, 1]} : vector<16x27xf32> to vector<16x1xf32>
    %c5 = arith.constant 5 : index
    %c0_16 = arith.constant 0 : index
    %56 = vector.load %arg5[%c5, %c0_16] : memref<27x256xf32, #tpu.memory_space<vmem>>, vector<1x256xf32>
    %57 = vector.broadcast %56 : vector<1x256xf32> to vector<16x256xf32>
    %58 = arith.mulf %57, %54 : vector<16x256xf32>
    %59 = vector.broadcast %55 : vector<16x1xf32> to vector<16x256xf32>
    %60 = arith.mulf %59, %58 : vector<16x256xf32>
    %61 = arith.addf %53, %60 : vector<16x256xf32>
    %c241_i32 = arith.constant 241 : i32
    %62 = tpu.dynamic_rotate %12 by %c241_i32 dim 1 : vector<16x256xf32>, i32 -> vector<16x256xf32>
    %63 = vector.extract_strided_slice %13 {offsets = [0, 6], sizes = [16, 1], strides = [1, 1]} : vector<16x27xf32> to vector<16x1xf32>
    %c6 = arith.constant 6 : index
    %c0_17 = arith.constant 0 : index
    %64 = vector.load %arg5[%c6, %c0_17] : memref<27x256xf32, #tpu.memory_space<vmem>>, vector<1x256xf32>
    %65 = vector.broadcast %64 : vector<1x256xf32> to vector<16x256xf32>
    %66 = arith.mulf %65, %62 : vector<16x256xf32>
    %67 = vector.broadcast %63 : vector<16x1xf32> to vector<16x256xf32>
    %68 = arith.mulf %67, %66 : vector<16x256xf32>
    %69 = arith.addf %61, %68 : vector<16x256xf32>
    %c240_i32 = arith.constant 240 : i32
    %70 = tpu.dynamic_rotate %12 by %c240_i32 dim 1 : vector<16x256xf32>, i32 -> vector<16x256xf32>
    %71 = vector.extract_strided_slice %13 {offsets = [0, 7], sizes = [16, 1], strides = [1, 1]} : vector<16x27xf32> to vector<16x1xf32>
    %c7 = arith.constant 7 : index
    %c0_18 = arith.constant 0 : index
    %72 = vector.load %arg5[%c7, %c0_18] : memref<27x256xf32, #tpu.memory_space<vmem>>, vector<1x256xf32>
    %73 = vector.broadcast %72 : vector<1x256xf32> to vector<16x256xf32>
    %74 = arith.mulf %73, %70 : vector<16x256xf32>
    %75 = vector.broadcast %71 : vector<16x1xf32> to vector<16x256xf32>
    %76 = arith.mulf %75, %74 : vector<16x256xf32>
    %77 = arith.addf %69, %76 : vector<16x256xf32>
    %c239_i32 = arith.constant 239 : i32
    %78 = tpu.dynamic_rotate %12 by %c239_i32 dim 1 : vector<16x256xf32>, i32 -> vector<16x256xf32>
    %79 = vector.extract_strided_slice %13 {offsets = [0, 8], sizes = [16, 1], strides = [1, 1]} : vector<16x27xf32> to vector<16x1xf32>
    %c8 = arith.constant 8 : index
    %c0_19 = arith.constant 0 : index
    %80 = vector.load %arg5[%c8, %c0_19] : memref<27x256xf32, #tpu.memory_space<vmem>>, vector<1x256xf32>
    %81 = vector.broadcast %80 : vector<1x256xf32> to vector<16x256xf32>
    %82 = arith.mulf %81, %78 : vector<16x256xf32>
    %83 = vector.broadcast %79 : vector<16x1xf32> to vector<16x256xf32>
    %84 = arith.mulf %83, %82 : vector<16x256xf32>
    %85 = arith.addf %77, %84 : vector<16x256xf32>
    %c34_i32 = arith.constant 34 : i32
    %86 = tpu.dynamic_rotate %12 by %c34_i32 dim 1 : vector<16x256xf32>, i32 -> vector<16x256xf32>
    %87 = vector.extract_strided_slice %13 {offsets = [0, 9], sizes = [16, 1], strides = [1, 1]} : vector<16x27xf32> to vector<16x1xf32>
    %c9 = arith.constant 9 : index
    %c0_20 = arith.constant 0 : index
    %88 = vector.load %arg5[%c9, %c0_20] : memref<27x256xf32, #tpu.memory_space<vmem>>, vector<1x256xf32>
    %89 = vector.broadcast %88 : vector<1x256xf32> to vector<16x256xf32>
    %90 = arith.mulf %89, %86 : vector<16x256xf32>
    %91 = vector.broadcast %87 : vector<16x1xf32> to vector<16x256xf32>
    %92 = arith.mulf %91, %90 : vector<16x256xf32>
    %93 = arith.addf %85, %92 : vector<16x256xf32>
    %c32_i32 = arith.constant 32 : i32
    %94 = tpu.dynamic_rotate %12 by %c32_i32 dim 1 : vector<16x256xf32>, i32 -> vector<16x256xf32>
    %95 = vector.extract_strided_slice %13 {offsets = [0, 10], sizes = [16, 1], strides = [1, 1]} : vector<16x27xf32> to vector<16x1xf32>
    %c10 = arith.constant 10 : index
    %c0_21 = arith.constant 0 : index
    %96 = vector.load %arg5[%c10, %c0_21] : memref<27x256xf32, #tpu.memory_space<vmem>>, vector<1x256xf32>
    %97 = vector.broadcast %96 : vector<1x256xf32> to vector<16x256xf32>
    %98 = arith.mulf %97, %94 : vector<16x256xf32>
    %99 = vector.broadcast %95 : vector<16x1xf32> to vector<16x256xf32>
    %100 = arith.mulf %99, %98 : vector<16x256xf32>
    %101 = arith.addf %93, %100 : vector<16x256xf32>
    %c30_i32 = arith.constant 30 : i32
    %102 = tpu.dynamic_rotate %12 by %c30_i32 dim 1 : vector<16x256xf32>, i32 -> vector<16x256xf32>
    %103 = vector.extract_strided_slice %13 {offsets = [0, 11], sizes = [16, 1], strides = [1, 1]} : vector<16x27xf32> to vector<16x1xf32>
    %c11 = arith.constant 11 : index
    %c0_22 = arith.constant 0 : index
    %104 = vector.load %arg5[%c11, %c0_22] : memref<27x256xf32, #tpu.memory_space<vmem>>, vector<1x256xf32>
    %105 = vector.broadcast %104 : vector<1x256xf32> to vector<16x256xf32>
    %106 = arith.mulf %105, %102 : vector<16x256xf32>
    %107 = vector.broadcast %103 : vector<16x1xf32> to vector<16x256xf32>
    %108 = arith.mulf %107, %106 : vector<16x256xf32>
    %109 = arith.addf %101, %108 : vector<16x256xf32>
    %c2_i32 = arith.constant 2 : i32
    %110 = tpu.dynamic_rotate %12 by %c2_i32 dim 1 : vector<16x256xf32>, i32 -> vector<16x256xf32>
    %111 = vector.extract_strided_slice %13 {offsets = [0, 12], sizes = [16, 1], strides = [1, 1]} : vector<16x27xf32> to vector<16x1xf32>
    %c12 = arith.constant 12 : index
    %c0_23 = arith.constant 0 : index
    %112 = vector.load %arg5[%c12, %c0_23] : memref<27x256xf32, #tpu.memory_space<vmem>>, vector<1x256xf32>
    %113 = vector.broadcast %112 : vector<1x256xf32> to vector<16x256xf32>
    %114 = arith.mulf %113, %110 : vector<16x256xf32>
    %115 = vector.broadcast %111 : vector<16x1xf32> to vector<16x256xf32>
    %116 = arith.mulf %115, %114 : vector<16x256xf32>
    %117 = arith.addf %109, %116 : vector<16x256xf32>
    %118 = vector.extract_strided_slice %13 {offsets = [0, 13], sizes = [16, 1], strides = [1, 1]} : vector<16x27xf32> to vector<16x1xf32>
    %c13 = arith.constant 13 : index
    %c0_24 = arith.constant 0 : index
    %119 = vector.load %arg5[%c13, %c0_24] : memref<27x256xf32, #tpu.memory_space<vmem>>, vector<1x256xf32>
    %120 = vector.broadcast %119 : vector<1x256xf32> to vector<16x256xf32>
    %121 = arith.mulf %120, %12 : vector<16x256xf32>
    %122 = vector.broadcast %118 : vector<16x1xf32> to vector<16x256xf32>
    %123 = arith.mulf %122, %121 : vector<16x256xf32>
    %124 = arith.addf %117, %123 : vector<16x256xf32>
    %c254_i32 = arith.constant 254 : i32
    %125 = tpu.dynamic_rotate %12 by %c254_i32 dim 1 : vector<16x256xf32>, i32 -> vector<16x256xf32>
    %126 = vector.extract_strided_slice %13 {offsets = [0, 14], sizes = [16, 1], strides = [1, 1]} : vector<16x27xf32> to vector<16x1xf32>
    %c14 = arith.constant 14 : index
    %c0_25 = arith.constant 0 : index
    %127 = vector.load %arg5[%c14, %c0_25] : memref<27x256xf32, #tpu.memory_space<vmem>>, vector<1x256xf32>
    %128 = vector.broadcast %127 : vector<1x256xf32> to vector<16x256xf32>
    %129 = arith.mulf %128, %125 : vector<16x256xf32>
    %130 = vector.broadcast %126 : vector<16x1xf32> to vector<16x256xf32>
    %131 = arith.mulf %130, %129 : vector<16x256xf32>
    %132 = arith.addf %124, %131 : vector<16x256xf32>
    %c226_i32 = arith.constant 226 : i32
    %133 = tpu.dynamic_rotate %12 by %c226_i32 dim 1 : vector<16x256xf32>, i32 -> vector<16x256xf32>
    %134 = vector.extract_strided_slice %13 {offsets = [0, 15], sizes = [16, 1], strides = [1, 1]} : vector<16x27xf32> to vector<16x1xf32>
    %c15 = arith.constant 15 : index
    %c0_26 = arith.constant 0 : index
    %135 = vector.load %arg5[%c15, %c0_26] : memref<27x256xf32, #tpu.memory_space<vmem>>, vector<1x256xf32>
    %136 = vector.broadcast %135 : vector<1x256xf32> to vector<16x256xf32>
    %137 = arith.mulf %136, %133 : vector<16x256xf32>
    %138 = vector.broadcast %134 : vector<16x1xf32> to vector<16x256xf32>
    %139 = arith.mulf %138, %137 : vector<16x256xf32>
    %140 = arith.addf %132, %139 : vector<16x256xf32>
    %c224_i32 = arith.constant 224 : i32
    %141 = tpu.dynamic_rotate %12 by %c224_i32 dim 1 : vector<16x256xf32>, i32 -> vector<16x256xf32>
    %142 = vector.extract_strided_slice %13 {offsets = [0, 16], sizes = [16, 1], strides = [1, 1]} : vector<16x27xf32> to vector<16x1xf32>
    %c16 = arith.constant 16 : index
    %c0_27 = arith.constant 0 : index
    %143 = vector.load %arg5[%c16, %c0_27] : memref<27x256xf32, #tpu.memory_space<vmem>>, vector<1x256xf32>
    %144 = vector.broadcast %143 : vector<1x256xf32> to vector<16x256xf32>
    %145 = arith.mulf %144, %141 : vector<16x256xf32>
    %146 = vector.broadcast %142 : vector<16x1xf32> to vector<16x256xf32>
    %147 = arith.mulf %146, %145 : vector<16x256xf32>
    %148 = arith.addf %140, %147 : vector<16x256xf32>
    %c222_i32 = arith.constant 222 : i32
    %149 = tpu.dynamic_rotate %12 by %c222_i32 dim 1 : vector<16x256xf32>, i32 -> vector<16x256xf32>
    %150 = vector.extract_strided_slice %13 {offsets = [0, 17], sizes = [16, 1], strides = [1, 1]} : vector<16x27xf32> to vector<16x1xf32>
    %c17 = arith.constant 17 : index
    %c0_28 = arith.constant 0 : index
    %151 = vector.load %arg5[%c17, %c0_28] : memref<27x256xf32, #tpu.memory_space<vmem>>, vector<1x256xf32>
    %152 = vector.broadcast %151 : vector<1x256xf32> to vector<16x256xf32>
    %153 = arith.mulf %152, %149 : vector<16x256xf32>
    %154 = vector.broadcast %150 : vector<16x1xf32> to vector<16x256xf32>
    %155 = arith.mulf %154, %153 : vector<16x256xf32>
    %156 = arith.addf %148, %155 : vector<16x256xf32>
    %c51_i32 = arith.constant 51 : i32
    %157 = tpu.dynamic_rotate %12 by %c51_i32 dim 1 : vector<16x256xf32>, i32 -> vector<16x256xf32>
    %158 = vector.extract_strided_slice %13 {offsets = [0, 18], sizes = [16, 1], strides = [1, 1]} : vector<16x27xf32> to vector<16x1xf32>
    %c18 = arith.constant 18 : index
    %c0_29 = arith.constant 0 : index
    %159 = vector.load %arg5[%c18, %c0_29] : memref<27x256xf32, #tpu.memory_space<vmem>>, vector<1x256xf32>
    %160 = vector.broadcast %159 : vector<1x256xf32> to vector<16x256xf32>
    %161 = arith.mulf %160, %157 : vector<16x256xf32>
    %162 = vector.broadcast %158 : vector<16x1xf32> to vector<16x256xf32>
    %163 = arith.mulf %162, %161 : vector<16x256xf32>
    %164 = arith.addf %156, %163 : vector<16x256xf32>
    %c48_i32 = arith.constant 48 : i32
    %165 = tpu.dynamic_rotate %12 by %c48_i32 dim 1 : vector<16x256xf32>, i32 -> vector<16x256xf32>
    %166 = vector.extract_strided_slice %13 {offsets = [0, 19], sizes = [16, 1], strides = [1, 1]} : vector<16x27xf32> to vector<16x1xf32>
    %c19 = arith.constant 19 : index
    %c0_30 = arith.constant 0 : index
    %167 = vector.load %arg5[%c19, %c0_30] : memref<27x256xf32, #tpu.memory_space<vmem>>, vector<1x256xf32>
    %168 = vector.broadcast %167 : vector<1x256xf32> to vector<16x256xf32>
    %169 = arith.mulf %168, %165 : vector<16x256xf32>
    %170 = vector.broadcast %166 : vector<16x1xf32> to vector<16x256xf32>
    %171 = arith.mulf %170, %169 : vector<16x256xf32>
    %172 = arith.addf %164, %171 : vector<16x256xf32>
    %c45_i32 = arith.constant 45 : i32
    %173 = tpu.dynamic_rotate %12 by %c45_i32 dim 1 : vector<16x256xf32>, i32 -> vector<16x256xf32>
    %174 = vector.extract_strided_slice %13 {offsets = [0, 20], sizes = [16, 1], strides = [1, 1]} : vector<16x27xf32> to vector<16x1xf32>
    %c20 = arith.constant 20 : index
    %c0_31 = arith.constant 0 : index
    %175 = vector.load %arg5[%c20, %c0_31] : memref<27x256xf32, #tpu.memory_space<vmem>>, vector<1x256xf32>
    %176 = vector.broadcast %175 : vector<1x256xf32> to vector<16x256xf32>
    %177 = arith.mulf %176, %173 : vector<16x256xf32>
    %178 = vector.broadcast %174 : vector<16x1xf32> to vector<16x256xf32>
    %179 = arith.mulf %178, %177 : vector<16x256xf32>
    %180 = arith.addf %172, %179 : vector<16x256xf32>
    %c3_i32 = arith.constant 3 : i32
    %181 = tpu.dynamic_rotate %12 by %c3_i32 dim 1 : vector<16x256xf32>, i32 -> vector<16x256xf32>
    %182 = vector.extract_strided_slice %13 {offsets = [0, 21], sizes = [16, 1], strides = [1, 1]} : vector<16x27xf32> to vector<16x1xf32>
    %c21 = arith.constant 21 : index
    %c0_32 = arith.constant 0 : index
    %183 = vector.load %arg5[%c21, %c0_32] : memref<27x256xf32, #tpu.memory_space<vmem>>, vector<1x256xf32>
    %184 = vector.broadcast %183 : vector<1x256xf32> to vector<16x256xf32>
    %185 = arith.mulf %184, %181 : vector<16x256xf32>
    %186 = vector.broadcast %182 : vector<16x1xf32> to vector<16x256xf32>
    %187 = arith.mulf %186, %185 : vector<16x256xf32>
    %188 = arith.addf %180, %187 : vector<16x256xf32>
    %189 = vector.extract_strided_slice %13 {offsets = [0, 22], sizes = [16, 1], strides = [1, 1]} : vector<16x27xf32> to vector<16x1xf32>
    %c22 = arith.constant 22 : index
    %c0_33 = arith.constant 0 : index
    %190 = vector.load %arg5[%c22, %c0_33] : memref<27x256xf32, #tpu.memory_space<vmem>>, vector<1x256xf32>
    %191 = vector.broadcast %190 : vector<1x256xf32> to vector<16x256xf32>
    %192 = arith.mulf %191, %12 : vector<16x256xf32>
    %193 = vector.broadcast %189 : vector<16x1xf32> to vector<16x256xf32>
    %194 = arith.mulf %193, %192 : vector<16x256xf32>
    %195 = arith.addf %188, %194 : vector<16x256xf32>
    %c253_i32 = arith.constant 253 : i32
    %196 = tpu.dynamic_rotate %12 by %c253_i32 dim 1 : vector<16x256xf32>, i32 -> vector<16x256xf32>
    %197 = vector.extract_strided_slice %13 {offsets = [0, 23], sizes = [16, 1], strides = [1, 1]} : vector<16x27xf32> to vector<16x1xf32>
    %c23 = arith.constant 23 : index
    %c0_34 = arith.constant 0 : index
    %198 = vector.load %arg5[%c23, %c0_34] : memref<27x256xf32, #tpu.memory_space<vmem>>, vector<1x256xf32>
    %199 = vector.broadcast %198 : vector<1x256xf32> to vector<16x256xf32>
    %200 = arith.mulf %199, %196 : vector<16x256xf32>
    %201 = vector.broadcast %197 : vector<16x1xf32> to vector<16x256xf32>
    %202 = arith.mulf %201, %200 : vector<16x256xf32>
    %203 = arith.addf %195, %202 : vector<16x256xf32>
    %c211_i32 = arith.constant 211 : i32
    %204 = tpu.dynamic_rotate %12 by %c211_i32 dim 1 : vector<16x256xf32>, i32 -> vector<16x256xf32>
    %205 = vector.extract_strided_slice %13 {offsets = [0, 24], sizes = [16, 1], strides = [1, 1]} : vector<16x27xf32> to vector<16x1xf32>
    %c24 = arith.constant 24 : index
    %c0_35 = arith.constant 0 : index
    %206 = vector.load %arg5[%c24, %c0_35] : memref<27x256xf32, #tpu.memory_space<vmem>>, vector<1x256xf32>
    %207 = vector.broadcast %206 : vector<1x256xf32> to vector<16x256xf32>
    %208 = arith.mulf %207, %204 : vector<16x256xf32>
    %209 = vector.broadcast %205 : vector<16x1xf32> to vector<16x256xf32>
    %210 = arith.mulf %209, %208 : vector<16x256xf32>
    %211 = arith.addf %203, %210 : vector<16x256xf32>
    %c208_i32 = arith.constant 208 : i32
    %212 = tpu.dynamic_rotate %12 by %c208_i32 dim 1 : vector<16x256xf32>, i32 -> vector<16x256xf32>
    %213 = vector.extract_strided_slice %13 {offsets = [0, 25], sizes = [16, 1], strides = [1, 1]} : vector<16x27xf32> to vector<16x1xf32>
    %c25 = arith.constant 25 : index
    %c0_36 = arith.constant 0 : index
    %214 = vector.load %arg5[%c25, %c0_36] : memref<27x256xf32, #tpu.memory_space<vmem>>, vector<1x256xf32>
    %215 = vector.broadcast %214 : vector<1x256xf32> to vector<16x256xf32>
    %216 = arith.mulf %215, %212 : vector<16x256xf32>
    %217 = vector.broadcast %213 : vector<16x1xf32> to vector<16x256xf32>
    %218 = arith.mulf %217, %216 : vector<16x256xf32>
    %219 = arith.addf %211, %218 : vector<16x256xf32>
    %c205_i32 = arith.constant 205 : i32
    %220 = tpu.dynamic_rotate %12 by %c205_i32 dim 1 : vector<16x256xf32>, i32 -> vector<16x256xf32>
    %221 = vector.extract_strided_slice %13 {offsets = [0, 26], sizes = [16, 1], strides = [1, 1]} : vector<16x27xf32> to vector<16x1xf32>
    %c26 = arith.constant 26 : index
    %c0_37 = arith.constant 0 : index
    %222 = vector.load %arg5[%c26, %c0_37] : memref<27x256xf32, #tpu.memory_space<vmem>>, vector<1x256xf32>
    %223 = vector.broadcast %222 : vector<1x256xf32> to vector<16x256xf32>
    %224 = arith.mulf %223, %220 : vector<16x256xf32>
    %225 = vector.broadcast %221 : vector<16x1xf32> to vector<16x256xf32>
    %226 = arith.mulf %225, %224 : vector<16x256xf32>
    %227 = arith.addf %219, %226 : vector<16x256xf32>
    %c0_38 = arith.constant 0 : index
    %c0_39 = arith.constant 0 : index
    %228 = vector.load %arg6[%c0_38, %c0_39] : memref<16x2xf32, #tpu.memory_space<vmem>>, vector<16x2xf32>
    %229 = vector.extract_strided_slice %228 {offsets = [0, 0], sizes = [16, 1], strides = [1, 1]} : vector<16x2xf32> to vector<16x1xf32>
    %230 = vector.broadcast %229 : vector<16x1xf32> to vector<16x256xf32>
    %231 = arith.mulf %227, %230 : vector<16x256xf32>
    %232 = vector.extract_strided_slice %228 {offsets = [0, 1], sizes = [16, 1], strides = [1, 1]} : vector<16x2xf32> to vector<16x1xf32>
    %233 = vector.broadcast %232 : vector<16x1xf32> to vector<16x256xf32>
    %234 = arith.addf %231, %233 : vector<16x256xf32>
    %cst_40 = arith.constant 0.000000e+00 : f32
    %235 = vector.broadcast %cst_40 : f32 to vector<16x256xf32>
    %236 = arith.maximumf %234, %235 : vector<16x256xf32>
    %c0_41 = arith.constant 0 : index
    %c0_42 = arith.constant 0 : index
    %237 = vector.load %arg8[%c0_41, %c0_42] : memref<4x2xf32, #tpu.memory_space<vmem>>, vector<4x2xf32>
    %c0_43 = arith.constant 0 : index
    %c0_44 = arith.constant 0 : index
    %238 = vector.load %arg7[%c0_43, %c0_44] : memref<4x16xf32, #tpu.memory_space<vmem>>, vector<4x16xf32>
    %cst_45 = arith.constant dense<0.000000e+00> : vector<4x256xf32>
    %239 = tpu.matmul %238, %236, %cst_45 {dimension_numbers = #tpu.dot_dimension_numbers<[1], [0], [0], [1], [0, 0, 1, 1], [], []>} : vector<4x16xf32>, vector<16x256xf32>, vector<4x256xf32> -> vector<4x256xf32>
    %240 = vector.extract_strided_slice %237 {offsets = [0, 0], sizes = [4, 1], strides = [1, 1]} : vector<4x2xf32> to vector<4x1xf32>
    %241 = vector.broadcast %240 : vector<4x1xf32> to vector<4x256xf32>
    %242 = arith.mulf %239, %241 : vector<4x256xf32>
    %243 = vector.extract_strided_slice %237 {offsets = [0, 1], sizes = [4, 1], strides = [1, 1]} : vector<4x2xf32> to vector<4x1xf32>
    %244 = vector.broadcast %243 : vector<4x1xf32> to vector<4x256xf32>
    %245 = arith.addf %242, %244 : vector<4x256xf32>
    %246 = arith.addf %245, %1 : vector<4x256xf32>
    %c0_46 = arith.constant 0 : index
    %c0_47 = arith.constant 0 : index
    %c0_48 = arith.constant 0 : index
    %247 = vector.load %arg9[%c0_46, %c0_47, %c0_48] : memref<1x4x256xf32, #tpu.memory_space<vmem>>, vector<1x4x256xf32>
    %248 = vector.shape_cast %247 : vector<1x4x256xf32> to vector<4x256xf32>
    %249 = vector.shape_cast %246 : vector<4x256xf32> to vector<1x4x256xf32>
    tpu.vector_store %arg9[%c0_46, %c0_47, %c0_48], %249 {strides = array<i32>} : memref<1x4x256xf32, #tpu.memory_space<vmem>>, vector<1x4x256xf32>,
    return
  }
  func.func @transform_0(%arg0: i32) -> (i32, i32, i32) {
    %c0_i32 = arith.constant 0 : i32
    %c0_i32_0 = arith.constant 0 : i32
    %c0_i32_1 = arith.constant 0 : i32
    return %arg0, %c0_i32, %c0_i32_0 : i32, i32, i32
  }
  func.func @transform_1(%arg0: i32) -> (i32, i32) {
    %c0_i32 = arith.constant 0 : i32
    %c0_i32_0 = arith.constant 0 : i32
    %c0_i32_1 = arith.constant 0 : i32
    return %c0_i32, %c0_i32_0 : i32, i32
  }
  func.func @transform_2(%arg0: i32) -> (i32, i32) {
    %c0_i32 = arith.constant 0 : i32
    %c0_i32_0 = arith.constant 0 : i32
    %c0_i32_1 = arith.constant 0 : i32
    return %c0_i32, %c0_i32_0 : i32, i32
  }
  func.func @transform_3(%arg0: i32) -> (i32, i32) {
    %c0_i32 = arith.constant 0 : i32
    %c0_i32_0 = arith.constant 0 : i32
    %c0_i32_1 = arith.constant 0 : i32
    return %c0_i32, %c0_i32_0 : i32, i32
  }
  func.func @transform_4(%arg0: i32) -> (i32, i32) {
    %c0_i32 = arith.constant 0 : i32
    %c0_i32_0 = arith.constant 0 : i32
    %c0_i32_1 = arith.constant 0 : i32
    return %c0_i32, %c0_i32_0 : i32, i32
  }
  func.func @transform_5(%arg0: i32) -> (i32, i32) {
    %c0_i32 = arith.constant 0 : i32
    %c0_i32_0 = arith.constant 0 : i32
    %c0_i32_1 = arith.constant 0 : i32
    return %c0_i32, %c0_i32_0 : i32, i32
  }
  func.func @transform_6(%arg0: i32) -> (i32, i32) {
    %c0_i32 = arith.constant 0 : i32
    %c0_i32_0 = arith.constant 0 : i32
    %c0_i32_1 = arith.constant 0 : i32
    return %c0_i32, %c0_i32_0 : i32, i32
  }
  func.func @transform_7(%arg0: i32) -> (i32, i32) {
    %c0_i32 = arith.constant 0 : i32
    %c0_i32_0 = arith.constant 0 : i32
    %c0_i32_1 = arith.constant 0 : i32
    return %c0_i32, %c0_i32_0 : i32, i32
  }
  func.func @transform_8(%arg0: i32) -> (i32, i32, i32) {
    %c0_i32 = arith.constant 0 : i32
    %c0_i32_0 = arith.constant 0 : i32
    %c0_i32_1 = arith.constant 0 : i32
    return %arg0, %c0_i32, %c0_i32_0 : i32, i32, i32
  }
}

</mosaic_0001>

<llo_original>
// kernel: cpr_forward.1
$region0: #{cpr_forward.1}
  #allocation0 [shape = 'u32[]', space=smem, size = 0x4, offset = 0x4, fixed_abs, tag = 'smem constant byte address 0x4 - core index']
  #allocation1 [shape = 'u32[144,128]{1,0:T(1,128)}', space=vmem, size = 0x12000, scoped, tag = 'internal scratch']
  %s0 = inlined_call_operand.vmem [shape: f32[2,4,256], index: 0, kind: input, shape index: {}]
  %s1 = inlined_call_operand.vmem [shape: f32[16,4], index: 1, kind: input, shape index: {}]
  %s2 = inlined_call_operand.vmem [shape: f32[16,2], index: 2, kind: input, shape index: {}]
  %s3 = inlined_call_operand.vmem [shape: f32[16,27], index: 3, kind: input, shape index: {}]
  %s4 = inlined_call_operand.vmem [shape: f32[27,256], index: 4, kind: input, shape index: {}]
  %s5 = inlined_call_operand.vmem [shape: f32[16,2], index: 5, kind: input, shape index: {}]
  %s6 = inlined_call_operand.vmem [shape: f32[4,16], index: 6, kind: input, shape index: {}]
  %s7 = inlined_call_operand.vmem [shape: f32[4,2], index: 7, kind: input, shape index: {}]
  %s8 = inlined_call_operand.vmem [shape: f32[2,4,256], index: 8, kind: output, shape index: {}]
  %s9 = sld [smem:[#allocation0]]
  $region65: #{cpr_forward.1} parent=0
    _
  %s11 = ssub.s32 1, %s9
  %s12 = scalar_select 0, %s11, %s9
  loop: start=0, step=1, limit=4
  $region2: #{cpr_forward.1} parent=0 // loop_pre_header
    _
  $region3: #{cpr_forward.1} parent=0 // loop_header
    %s14 = sphi 0, %s18
    %p15 = scmp.ge.s32.totalorder %s14, 4
    %s24 = sphi 0, %s26
    %s27 = sphi 0, %s24
    %s28 = sphi 0, %s27
    %s44 = sphi 0, %s28
    %s48 = sphi 0, %s48
    %s50 = sphi 0, %s48
    %s51 = sphi 0, %s50
    %s65 = sphi 0, %s51
    %s69 = sphi 0, %s69
    %s71 = sphi 0, %s69
    %s72 = sphi 0, %s71
    %s86 = sphi 0, %s72
    %s90 = sphi 0, %s90
    %s92 = sphi 0, %s90
    %s93 = sphi 0, %s92
    %s107 = sphi 0, %s93
    %s111 = sphi 0, %s111
    %s113 = sphi 0, %s111
    %s114 = sphi 0, %s113
    %s128 = sphi 0, %s114
    %s132 = sphi 0, %s132
    %s134 = sphi 0, %s132
    %s135 = sphi 0, %s134
    %s149 = sphi 0, %s135
    %s153 = sphi 0, %s153
    %s155 = sphi 0, %s153
    %s156 = sphi 0, %s155
    %s170 = sphi 0, %s156
    %s174 = sphi 0, %s174
    %s176 = sphi 0, %s174
    %s177 = sphi 0, %s176
    %s191 = sphi 0, %s177
    %s197 = sphi 0, %s199
    %s200 = sphi 0, %s197
    %s201 = sphi 0, %s200
    %s217 = sphi 0, %s201
  $region4: #{cpr_forward.1} parent=0 // loop_header_branch
    %17 = sbr.rel (%p15) target = $region8
  $region5: #{cpr_forward.1} parent=0 // loop_body
    %s19 = ssub.s32 %s14, 1
    %s20 = ssub.s32 %s14, 2
    %s21 = sadd.s32 %s14, 1
    %s22 = ssub.s32 %s14, %s21
    %p23 = scmp.eq.s32.totalorder %s22, 0
    %s25 = sadd.s32 %s24, 1
    %s26 = scalar_select %p23, %s24, %s25
    %p29 = pneg %p23
    %p30 = scmp.eq.s32.totalorder %s14, 1
    %p31 = por %p29, %p30
    %p32 = scmp.ne.s32.totalorder %s24, %s27
    %p33 = scmp.eq.s32.totalorder %s14, 0
    %p34 = por %p32, %p33
    %p35 = scmp.ne.s32.totalorder %s24, %s27
    %p36 = scmp.eq.s32.totalorder %s19, 1
    %p37 = por %p35, %p36
    %p38 = scmp.ne.s32.totalorder %s27, %s28
    %p39 = scmp.eq.s32.totalorder %s19, 0
    %p40 = por %p38, %p39
    %p41 = scmp.ne.s32.totalorder %s27, %s28
    %p42 = scmp.eq.s32.totalorder %s20, 1
    %p43 = por %p41, %p42
    %p45 = scmp.ne.s32.totalorder %s28, %s44
    %p46 = scmp.eq.s32.totalorder %s20, 0
    %p47 = por %p45, %p46
    %s49 = sadd.s32 %s48, 1
    %p52 = scmp.eq.s32.totalorder %s14, 1
    %p53 = scmp.ne.s32.totalorder %s48, %s50
    %p54 = scmp.eq.s32.totalorder %s14, 0
    %p55 = por %p53, %p54
    %p56 = scmp.ne.s32.totalorder %s48, %s50
    %p57 = scmp.eq.s32.totalorder %s19, 1
    %p58 = por %p56, %p57
    %p59 = scmp.ne.s32.totalorder %s50, %s51
    %p60 = scmp.eq.s32.totalorder %s19, 0
    %p61 = por %p59, %p60
    %p62 = scmp.ne.s32.totalorder %s50, %s51
    %p63 = scmp.eq.s32.totalorder %s20, 1
    %p64 = por %p62, %p63
    %p66 = scmp.ne.s32.totalorder %s51, %s65
    %p67 = scmp.eq.s32.totalorder %s20, 0
    %p68 = por %p66, %p67
    %s70 = sadd.s32 %s69, 1
    %p73 = scmp.eq.s32.totalorder %s14, 1
    %p74 = scmp.ne.s32.totalorder %s69, %s71
    %p75 = scmp.eq.s32.totalorder %s14, 0
    %p76 = por %p74, %p75
    %p77 = scmp.ne.s32.totalorder %s69, %s71
    %p78 = scmp.eq.s32.totalorder %s19, 1
    %p79 = por %p77, %p78
    %p80 = scmp.ne.s32.totalorder %s71, %s72
    %p81 = scmp.eq.s32.totalorder %s19, 0
    %p82 = por %p80, %p81
    %p83 = scmp.ne.s32.totalorder %s71, %s72
    %p84 = scmp.eq.s32.totalorder %s20, 1
    %p85 = por %p83, %p84
    %p87 = scmp.ne.s32.totalorder %s72, %s86
    %p88 = scmp.eq.s32.totalorder %s20, 0
    %p89 = por %p87, %p88
    %s91 = sadd.s32 %s90, 1
    %p94 = scmp.eq.s32.totalorder %s14, 1
    %p95 = scmp.ne.s32.totalorder %s90, %s92
    %p96 = scmp.eq.s32.totalorder %s14, 0
    %p97 = por %p95, %p96
    %p98 = scmp.ne.s32.totalorder %s90, %s92
    %p99 = scmp.eq.s32.totalorder %s19, 1
    %p100 = por %p98, %p99
    %p101 = scmp.ne.s32.totalorder %s92, %s93
    %p102 = scmp.eq.s32.totalorder %s19, 0
    %p103 = por %p101, %p102
    %p104 = scmp.ne.s32.totalorder %s92, %s93
    %p105 = scmp.eq.s32.totalorder %s20, 1
    %p106 = por %p104, %p105
    %p108 = scmp.ne.s32.totalorder %s93, %s107
    %p109 = scmp.eq.s32.totalorder %s20, 0
    %p110 = por %p108, %p109
    %s112 = sadd.s32 %s111, 1
    %p115 = scmp.eq.s32.totalorder %s14, 1
    %p116 = scmp.ne.s32.totalorder %s111, %s113
    %p117 = scmp.eq.s32.totalorder %s14, 0
    %p118 = por %p116, %p117
    %p119 = scmp.ne.s32.totalorder %s111, %s113
    %p120 = scmp.eq.s32.totalorder %s19, 1
    %p121 = por %p119, %p120
    %p122 = scmp.ne.s32.totalorder %s113, %s114
    %p123 = scmp.eq.s32.totalorder %s19, 0
    %p124 = por %p122, %p123
    %p125 = scmp.ne.s32.totalorder %s113, %s114
    %p126 = scmp.eq.s32.totalorder %s20, 1
    %p127 = por %p125, %p126
    %p129 = scmp.ne.s32.totalorder %s114, %s128
    %p130 = scmp.eq.s32.totalorder %s20, 0
    %p131 = por %p129, %p130
    %s133 = sadd.s32 %s132, 1
    %p136 = scmp.eq.s32.totalorder %s14, 1
    %p137 = scmp.ne.s32.totalorder %s132, %s134
    %p138 = scmp.eq.s32.totalorder %s14, 0
    %p139 = por %p137, %p138
    %p140 = scmp.ne.s32.totalorder %s132, %s134
    %p141 = scmp.eq.s32.totalorder %s19, 1
    %p142 = por %p140, %p141
    %p143 = scmp.ne.s32.totalorder %s134, %s135
    %p144 = scmp.eq.s32.totalorder %s19, 0
    %p145 = por %p143, %p144
    %p146 = scmp.ne.s32.totalorder %s134, %s135
    %p147 = scmp.eq.s32.totalorder %s20, 1
    %p148 = por %p146, %p147
    %p150 = scmp.ne.s32.totalorder %s135, %s149
    %p151 = scmp.eq.s32.totalorder %s20, 0
    %p152 = por %p150, %p151
    %s154 = sadd.s32 %s153, 1
    %p157 = scmp.eq.s32.totalorder %s14, 1
    %p158 = scmp.ne.s32.totalorder %s153, %s155
    %p159 = scmp.eq.s32.totalorder %s14, 0
    %p160 = por %p158, %p159
    %p161 = scmp.ne.s32.totalorder %s153, %s155
    %p162 = scmp.eq.s32.totalorder %s19, 1
    %p163 = por %p161, %p162
    %p164 = scmp.ne.s32.totalorder %s155, %s156
    %p165 = scmp.eq.s32.totalorder %s19, 0
    %p166 = por %p164, %p165
    %p167 = scmp.ne.s32.totalorder %s155, %s156
    %p168 = scmp.eq.s32.totalorder %s20, 1
    %p169 = por %p167, %p168
    %p171 = scmp.ne.s32.totalorder %s156, %s170
    %p172 = scmp.eq.s32.totalorder %s20, 0
    %p173 = por %p171, %p172
    %s175 = sadd.s32 %s174, 1
    %p178 = scmp.eq.s32.totalorder %s14, 1
    %p179 = scmp.ne.s32.totalorder %s174, %s176
    %p180 = scmp.eq.s32.totalorder %s14, 0
    %p181 = por %p179, %p180
    %p182 = scmp.ne.s32.totalorder %s174, %s176
    %p183 = scmp.eq.s32.totalorder %s19, 1
    %p184 = por %p182, %p183
    %p185 = scmp.ne.s32.totalorder %s176, %s177
    %p186 = scmp.eq.s32.totalorder %s19, 0
    %p187 = por %p185, %p186
    %p188 = scmp.ne.s32.totalorder %s176, %s177
    %p189 = scmp.eq.s32.totalorder %s20, 1
    %p190 = por %p188, %p189
    %p192 = scmp.ne.s32.totalorder %s177, %s191
    %p193 = scmp.eq.s32.totalorder %s20, 0
    %p194 = por %p192, %p193
    %s195 = ssub.s32 %s14, %s21
    %p196 = scmp.eq.s32.totalorder %s195, 0
    %s198 = sadd.s32 %s197, 1
    %s199 = scalar_select %p196, %s197, %s198
    %p202 = pneg %p196
    %p203 = scmp.eq.s32.totalorder %s14, 1
    %p204 = por %p202, %p203
    %p205 = scmp.ne.s32.totalorder %s197, %s200
    %p206 = scmp.eq.s32.totalorder %s14, 0
    %p207 = por %p205, %p206
    %p208 = scmp.ne.s32.totalorder %s197, %s200
    %p209 = scmp.eq.s32.totalorder %s19, 1
    %p210 = por %p208, %p209
    %p211 = scmp.ne.s32.totalorder %s200, %s201
    %p212 = scmp.eq.s32.totalorder %s19, 0
    %p213 = por %p211, %p212
    %p214 = scmp.ne.s32.totalorder %s200, %s201
    %p215 = scmp.eq.s32.totalorder %s20, 1
    %p216 = por %p214, %p215
    %p218 = scmp.ne.s32.totalorder %s201, %s217
    %p219 = scmp.eq.s32.totalorder %s20, 0
    %p220 = por %p218, %p219
    %p221 = scmp.le.s32.totalorder 1, %s14
    %p222 = scmp.lt.s32.totalorder %s14, 3
    %p223 = pnand %p221, %p222
    %p224 = pneg %p223
    // Predicated region
    $region9: #{cpr_forward.1} parent=5 // pred_check
      _
    $region10: #{cpr_forward.1} parent=5 // pred_check_branch
      %226 = sbr.rel (%p223) target = $region12
    $region11: #{cpr_forward.1} parent=5 // pred_region
      %s227 = ssub.s32 %s14, 1
      // Predicated region
      $region13: #{cpr_forward.1} parent=11 // pred_check
        %p228 = pneg %p61
      $region14: #{cpr_forward.1} parent=11 // pred_check_branch
        %230 = sbr.rel (%p228) target = $region16
      $region15: #{cpr_forward.1} parent=11 // pred_region
        _
      $region16: #{cpr_forward.1} parent=11 // pred_fallthru
        _
      // Predicated region
      $region17: #{cpr_forward.1} parent=11 // pred_check
        %p231 = pneg %p82
      $region18: #{cpr_forward.1} parent=11 // pred_check_branch
        %233 = sbr.rel (%p231) target = $region20
      $region19: #{cpr_forward.1} parent=11 // pred_region
        _
      $region20: #{cpr_forward.1} parent=11 // pred_fallthru
        _
      // Predicated region
      $region21: #{cpr_forward.1} parent=11 // pred_check
        %p234 = pneg %p103
      $region22: #{cpr_forward.1} parent=11 // pred_check_branch
        %236 = sbr.rel (%p234) target = $region24
      $region23: #{cpr_forward.1} parent=11 // pred_region
        _
      $region24: #{cpr_forward.1} parent=11 // pred_fallthru
        _
      // Predicated region
      $region25: #{cpr_forward.1} parent=11 // pred_check
        %p237 = pneg %p124
      $region26: #{cpr_forward.1} parent=11 // pred_check_branch
        %239 = sbr.rel (%p237) target = $region28
      $region27: #{cpr_forward.1} parent=11 // pred_region
        _
      $region28: #{cpr_forward.1} parent=11 // pred_fallthru
        _
      // Predicated region
      $region29: #{cpr_forward.1} parent=11 // pred_check
        %p240 = pneg %p145
      $region30: #{cpr_forward.1} parent=11 // pred_check_branch
        %242 = sbr.rel (%p240) target = $region32
      $region31: #{cpr_forward.1} parent=11 // pred_region
        _
      $region32: #{cpr_forward.1} parent=11 // pred_fallthru
        _
      // Predicated region
      $region33: #{cpr_forward.1} parent=11 // pred_check
        %p243 = pneg %p166
      $region34: #{cpr_forward.1} parent=11 // pred_check_branch
        %245 = sbr.rel (%p243) target = $region36
      $region35: #{cpr_forward.1} parent=11 // pred_region
        _
      $region36: #{cpr_forward.1} parent=11 // pred_fallthru
        _
      // Predicated region
      $region37: #{cpr_forward.1} parent=11 // pred_check
        %p246 = pneg %p187
      $region38: #{cpr_forward.1} parent=11 // pred_check_branch
        %248 = sbr.rel (%p246) target = $region40
      $region39: #{cpr_forward.1} parent=11 // pred_region
        _
      $region40: #{cpr_forward.1} parent=11 // pred_fallthru
        _
    $region12: #{cpr_forward.1} parent=5 // pred_fallthru
      _
    %p249 = scmp.lt.s32.totalorder %s14, 2
    // Predicated region
    $region41: #{cpr_forward.1} parent=5 // pred_check
      %p250 = pneg %p249
    $region42: #{cpr_forward.1} parent=5 // pred_check_branch
      %252 = sbr.rel (%p250) target = $region44
    $region43: #{cpr_forward.1} parent=5 // pred_region
      // Predicated region
      $region45: #{cpr_forward.1} parent=43 // pred_check
        %p253 = pneg %p34
      $region46: #{cpr_forward.1} parent=43 // pred_check_branch
        %255 = sbr.rel (%p253) target = $region48
      $region47: #{cpr_forward.1} parent=43 // pred_region
        %p256 = scmp.lt.s32.totalorder %s14, 1
        %s257 = scalar_select %p256, %s14, 1
        %s258 = smul.addr %s257, 2
        %s259 = smul.addr %s258, 4
        %s260 = scalar_lea.vmem %s0, %s259
      $region48: #{cpr_forward.1} parent=43 // pred_fallthru
        _
    $region44: #{cpr_forward.1} parent=5 // pred_fallthru
      _
    %p261 = scmp.le.s32.totalorder 1, %s14
    %p262 = scmp.lt.s32.totalorder %s14, 3
    %p263 = pnand %p261, %p262
    %p264 = pneg %p263
    // Predicated region
    $region49: #{cpr_forward.1} parent=5 // pred_check
      _
    $region50: #{cpr_forward.1} parent=5 // pred_check_branch
      %266 = sbr.rel (%p263) target = $region52
    $region51: #{cpr_forward.1} parent=5 // pred_region
      %s267 = ssub.s32 %s14, 1
      %p268 = scmp.lt.s32.totalorder %s19, 1
      %s269 = scalar_select %p268, %s19, 1
      %s270 = smul.addr %s269, 2
      %s271 = smul.addr %s270, 4
      %s272 = scalar_lea.vmem %s0, %s271
      %p273 = pneg %p40
      %p274 = pneg %p37
      %p275 = pneg %p61
      %p276 = pneg %p58
      %p277 = pneg %p82
      %p278 = pneg %p79
      %p279 = pneg %p103
      %p280 = pneg %p100
      %p281 = pneg %p124
      %p282 = pneg %p121
      %p283 = pneg %p145
      %p284 = pneg %p142
      %p285 = pneg %p166
      %p286 = pneg %p163
      %p287 = pneg %p187
      %p288 = pneg %p184
      %p289 = pneg %p213
      %p290 = pneg %p210
      %p291 = scmp.lt.s32.totalorder %s19, 1
      %s292 = scalar_select %p291, %s19, 1
      %s293 = smul.addr %s292, 2
      %s294 = smul.addr %s293, 4
      %s295 = scalar_lea.vmem %s8, %s294
      %p296 = scmp.lt.s32.totalorder %s19, 1
      %s297 = scalar_select %p296, %s19, 1
      %s298 = smul.addr %s297, 2
      %s299 = smul.addr %s298, 4
      %s300 = scalar_lea.vmem %s0, %s299
      %p301 = scmp.lt.s32.totalorder %s19, 1
      %s302 = scalar_select %p301, %s19, 1
      %s303 = smul.addr %s302, 2
      %s304 = smul.addr %s303, 4
      %s305 = scalar_lea.vmem %s8, %s304
      %v306 = vld [vmem:[%s300] sm:$0xff]
      %v307 = vld [vmem:[%s2] sm:$0xff]
      %v308 = vld [vmem:[%s2 + $0x8] sm:$0xff]
      %v309 = vld [vmem:[%s1] sm:$0xff]
      %v310 = vld [vmem:[%s1 + $0x8] sm:$0xff]
      %v312 = vcombine.high %v306, %v306
      %vm313 = vcmask 31744
      %v315 = vsel %vm313, %v309, 0
      %v318 = vsel %vm313, %v310, 0
      %vm320 = vcmask 1043456
      %v321 = vsel %vm320, %v306, 0
      %v323 = vsel %vm320, %v312, 0
      %325 = vmatprep.subr.mxu0 0.0
      %326 = vmatpush1.msra.mxu0 0.0
      %327 = vmatprep.subr.mxu0 0.0
      %328 = vmatpush1.msra.mxu0 0.0
      %329 = vmatprep.subr.mxu0 0.0
      %330 = vmatpush1.msra.mxu0 0.0
      %331 = vmatprep.subr.mxu0 0.0
      %332 = vmatpush1.msra.mxu0 0.0
      %333 = vmatprep.subr.mxu0 0.0
      %334 = vmatpush1.msra.mxu0 0.0
      %335 = vmatprep.subr.mxu0 0.0
      %336 = vmatpush1.msra.mxu0 0.0
      %337 = vmatprep.subr.mxu0 0.0
      %338 = vmatpush1.msra.mxu0 0.0
      %339 = vmatprep.subr.mxu0 0.0
      %340 = vmatpush1.msra.mxu0 0.0
      %341 = vmatprep.subr.mxu0 0.0
      %342 = vmatpush1.msra.mxu0 0.0
      %343 = vmatprep.subr.mxu0 0.0
      %344 = vmatpush1.msra.mxu0 0.0
      %345 = vmatprep.subr.mxu0 0.0
      %346 = vmatpush1.msra.mxu0 0.0
      %347 = vmatprep.subr.mxu0 0.0
      %348 = vmatpush1.msra.mxu0 0.0
      %349 = vmatprep.subr.mxu0 0.0
      %350 = vmatpush1.msra.mxu0 0.0
      %351 = vmatprep.subr.mxu0 0.0
      %352 = vmatpush1.msra.mxu0 0.0
      %353 = vmatprep.subr.mxu0 0.0
      %354 = vmatpush1.msra.mxu0 0.0
      %355 = vmatprep.subr.mxu0 %v323
      %356 = vmatpush1.msra.mxu0 %v321
      %357 = vmatprep.subr.mxu0 0.0
      %358 = vmatpush2.msra.mxu0 0.0
      %359 = vmatprep.subr.mxu0 0.0
      %360 = vmatpush2.msra.mxu0 0.0
      %361 = vmatprep.subr.mxu0 0.0
      %362 = vmatpush2.msra.mxu0 0.0
      %363 = vmatprep.subr.mxu0 0.0
      %364 = vmatpush2.msra.mxu0 0.0
      %365 = vmatprep.subr.mxu0 0.0
      %366 = vmatpush2.msra.mxu0 0.0
      %367 = vmatprep.subr.mxu0 0.0
      %368 = vmatpush2.msra.mxu0 0.0
      %369 = vmatprep.subr.mxu0 0.0
      %370 = vmatpush2.msra.mxu0 0.0
      %371 = vmatprep.subr.mxu0 0.0
      %372 = vmatpush2.msra.mxu0 0.0
      %373 = vmatprep.subr.mxu0 0.0
      %374 = vmatpush2.msra.mxu0 0.0
      %375 = vmatprep.subr.mxu0 0.0
      %376 = vmatpush2.msra.mxu0 0.0
      %377 = vmatprep.subr.mxu0 0.0
      %378 = vmatpush2.msra.mxu0 0.0
      %379 = vmatprep.subr.mxu0 0.0
      %380 = vmatpush2.msra.mxu0 0.0
      %381 = vmatprep.subr.mxu0 0.0
      %382 = vmatpush2.msra.mxu0 0.0
      %383 = vmatprep.subr.mxu0 0.0
      %384 = vmatpush2.msra.mxu0 0.0
      %385 = vmatprep.subr.mxu0 0.0
      %386 = vmatpush2.msra.mxu0 0.0
      %387 = vmatprep.subr.mxu0 0.0
      %388 = vmatpush2.msra.mxu0 0.0
      %389 = vmatprep.mubr.f32.mxu0 0.0
      %390 = vmatmul.mubr.f32.gmra.mxu0 %v315
      %v391 = vpop.f32.mrf.mxu0
      %v392 = vadd.f32 0.0, %v391
      %v393 = vpop.f32.mrf.mxu0
      %v394 = vadd.f32 0.0, %v393
      %395 = vmatprep.mubr.f32.mxu0 0.0
      %396 = vmatmul.mubr.f32.gmra.mxu0 %v318
      %v397 = vpop.f32.mrf.mxu0
      %v398 = vadd.f32 0.0, %v397
      %v399 = vpop.f32.mrf.mxu0
      %v400 = vadd.f32 0.0, %v399
      %401 = vdwg.mxu0
      %403 = vset.pattern.permute.xlu0 0
      %404 = vperm.xlu0 %403, %v307
      %v405 = vpop.permute.xlu0 %404
      %408 = vset.pattern.permute.xlu0 0
      %409 = vperm.xlu0 %408, %v308
      %v410 = vpop.permute.xlu0 %409
      %v412 = vmul.f32 %v392, %v405
      %v413 = vmul.f32 %v394, %v405
      %v414 = vmul.f32 %v398, %v410
      %v415 = vmul.f32 %v400, %v410
      %416 = vset.pattern.permute.xlu0 1
      %417 = vperm.xlu0 %416, %v307
      %v418 = vpop.permute.xlu0 %417
      %420 = vset.pattern.permute.xlu0 1
      %421 = vperm.xlu0 %420, %v308
      %v422 = vpop.permute.xlu0 %421
      %v424 = vadd.f32 %v412, %v418
      %v425 = vadd.f32 %v413, %v418
      %v426 = vadd.f32 %v414, %v422
      %v427 = vadd.f32 %v415, %v422
      %v428 = vmax.f32 %v424, 0.0
      %v429 = vmax.f32 %v425, 0.0
      %v430 = vmax.f32 %v426, 0.0
      %v431 = vmax.f32 %v427, 0.0
      %v432 = vld [vmem:[%s3] sm:$0xff]
      %v433 = vld [vmem:[%s3 + $0x8] sm:$0xff]
      %434 = vrot.lane.b32.xlu0 %v428, 17
      %v435 = vpop.permute.xlu0 %434
      %436 = vrot.lane.b32.xlu0 %v430, 17
      %v437 = vpop.permute.xlu0 %436
      %438 = vrot.lane.b32.xlu0 %v429, 17
      %v439 = vpop.permute.xlu0 %438
      %440 = vrot.lane.b32.xlu0 %v431, 17
      %v441 = vpop.permute.xlu0 %440
      %v442 = vlaneseq
      %v443 = vand.u32 %v442, 127
      %vm444 = vcmp.lt.s32.totalorder %v443, 17
      %v445 = vsel %vm444, %v435, %v439
      %v446 = vsel %vm444, %v437, %v441
      %v447 = vsel %vm444, %v439, %v435
      %v448 = vsel %vm444, %v441, %v437
      %v449 = vld [vmem:[%s4] ss:$8 sm:$0x3]
      %v451 = vlaneseq
      %v452 = vshrl.u32 %v451, 7
      %v453 = vsub.s32 0, %v452
      %v454 = vrot.slane %v449, %v453
      %v455 = vlaneseq
      %v456 = vshrl.u32 %v455, 7
      %v457 = vsub.s32 1, %v456
      %v458 = vrot.slane %v449, %v457
      %v461 = vmul.f32 %v454, %v447
      %v462 = vmul.f32 %v458, %v445
      %v463 = vmul.f32 %v454, %v448
      %v464 = vmul.f32 %v458, %v446
      %466 = vset.pattern.permute.xlu0 0
      %467 = vperm.xlu0 %466, %v432
      %v468 = vpop.permute.xlu0 %467
      %471 = vset.pattern.permute.xlu0 0
      %472 = vperm.xlu0 %471, %v433
      %v473 = vpop.permute.xlu0 %472
      %v475 = vmul.f32 %v468, %v461
      %v476 = vmul.f32 %v468, %v462
      %v477 = vmul.f32 %v473, %v463
      %v478 = vmul.f32 %v473, %v464
      %v479 = vadd.f32 %v475, 0.0
      %v480 = vadd.f32 %v476, 0.0
      %v481 = vadd.f32 %v477, 0.0
      %v482 = vadd.f32 %v478, 0.0
      %483 = vrot.lane.b32.xlu0 %v428, 16
      %v484 = vpop.permute.xlu0 %483
      %485 = vrot.lane.b32.xlu0 %v430, 16
      %v486 = vpop.permute.xlu0 %485
      %487 = vrot.lane.b32.xlu0 %v429, 16
      %v488 = vpop.permute.xlu0 %487
      %489 = vrot.lane.b32.xlu0 %v431, 16
      %v490 = vpop.permute.xlu0 %489
      %vm491 = vcmp.lt.s32.totalorder %v443, 16
      %v492 = vsel %vm491, %v484, %v488
      %v493 = vsel %vm491, %v486, %v490
      %v494 = vsel %vm491, %v488, %v484
      %v495 = vsel %vm491, %v490, %v486
      %s496 = scalar_lea.vmem %s4, 1
      %v497 = vld [vmem:[%s496] ss:$8 sm:$0x3]
      %v499 = vlaneseq
      %v500 = vshrl.u32 %v499, 7
      %v501 = vsub.s32 0, %v500
      %v502 = vrot.slane %v497, %v501
      %v503 = vlaneseq
      %v504 = vshrl.u32 %v503, 7
      %v505 = vsub.s32 1, %v504
      %v506 = vrot.slane %v497, %v505
      %v509 = vmul.f32 %v502, %v494
      %v510 = vmul.f32 %v506, %v492
      %v511 = vmul.f32 %v502, %v495
      %v512 = vmul.f32 %v506, %v493
      %513 = vset.pattern.permute.xlu0 1
      %514 = vperm.xlu0 %513, %v432
      %v515 = vpop.permute.xlu0 %514
      %517 = vset.pattern.permute.xlu0 1
      %518 = vperm.xlu0 %517, %v433
      %v519 = vpop.permute.xlu0 %518
      %v521 = vmul.f32 %v515, %v509
      %v522 = vmul.f32 %v515, %v510
      %v523 = vmul.f32 %v519, %v511
      %v524 = vmul.f32 %v519, %v512
      %v525 = vadd.f32 %v479, %v521
      %v526 = vadd.f32 %v480, %v522
      %v527 = vadd.f32 %v481, %v523
      %v528 = vadd.f32 %v482, %v524
      %529 = vrot.lane.b32.xlu0 %v428, 15
      %v530 = vpop.permute.xlu0 %529
      %531 = vrot.lane.b32.xlu0 %v430, 15
      %v532 = vpop.permute.xlu0 %531
      %533 = vrot.lane.b32.xlu0 %v429, 15
      %v534 = vpop.permute.xlu0 %533
      %535 = vrot.lane.b32.xlu0 %v431, 15
      %v536 = vpop.permute.xlu0 %535
      %vm537 = vcmp.lt.s32.totalorder %v443, 15
      %v538 = vsel %vm537, %v530, %v534
      %v539 = vsel %vm537, %v532, %v536
      %v540 = vsel %vm537, %v534, %v530
      %v541 = vsel %vm537, %v536, %v532
      %s542 = scalar_lea.vmem %s4, 2
      %v543 = vld [vmem:[%s542] ss:$8 sm:$0x3]
      %v545 = vlaneseq
      %v546 = vshrl.u32 %v545, 7
      %v547 = vsub.s32 0, %v546
      %v548 = vrot.slane %v543, %v547
      %v549 = vlaneseq
      %v550 = vshrl.u32 %v549, 7
      %v551 = vsub.s32 1, %v550
      %v552 = vrot.slane %v543, %v551
      %v555 = vmul.f32 %v548, %v540
      %v556 = vmul.f32 %v552, %v538
      %v557 = vmul.f32 %v548, %v541
      %v558 = vmul.f32 %v552, %v539
      %559 = vset.pattern.permute.xlu0 2
      %560 = vperm.xlu0 %559, %v432
      %v561 = vpop.permute.xlu0 %560
      %563 = vset.pattern.permute.xlu0 2
      %564 = vperm.xlu0 %563, %v433
      %v565 = vpop.permute.xlu0 %564
      %v567 = vmul.f32 %v561, %v555
      %v568 = vmul.f32 %v561, %v556
      %v569 = vmul.f32 %v565, %v557
      %v570 = vmul.f32 %v565, %v558
      %v571 = vadd.f32 %v525, %v567
      %v572 = vadd.f32 %v526, %v568
      %v573 = vadd.f32 %v527, %v569
      %v574 = vadd.f32 %v528, %v570
      %575 = vrot.lane.b32.xlu0 %v428, 1
      %v576 = vpop.permute.xlu0 %575
      %577 = vrot.lane.b32.xlu0 %v430, 1
      %v578 = vpop.permute.xlu0 %577
      %579 = vrot.lane.b32.xlu0 %v429, 1
      %v580 = vpop.permute.xlu0 %579
      %581 = vrot.lane.b32.xlu0 %v431, 1
      %v582 = vpop.permute.xlu0 %581
      %vm583 = vcmp.lt.s32.totalorder %v443, 1
      %v584 = vsel %vm583, %v576, %v580
      %v585 = vsel %vm583, %v578, %v582
      %v586 = vsel %vm583, %v580, %v576
      %v587 = vsel %vm583, %v582, %v578
      %s588 = scalar_lea.vmem %s4, 3
      %v589 = vld [vmem:[%s588] ss:$8 sm:$0x3]
      %v591 = vlaneseq
      %v592 = vshrl.u32 %v591, 7
      %v593 = vsub.s32 0, %v592
      %v594 = vrot.slane %v589, %v593
      %v595 = vlaneseq
      %v596 = vshrl.u32 %v595, 7
      %v597 = vsub.s32 1, %v596
      %v598 = vrot.slane %v589, %v597
      %v601 = vmul.f32 %v594, %v586
      %v602 = vmul.f32 %v598, %v584
      %v603 = vmul.f32 %v594, %v587
      %v604 = vmul.f32 %v598, %v585
      %605 = vset.pattern.permute.xlu0 3
      %606 = vperm.xlu0 %605, %v432
      %v607 = vpop.permute.xlu0 %606
      %609 = vset.pattern.permute.xlu0 3
      %610 = vperm.xlu0 %609, %v433
      %v611 = vpop.permute.xlu0 %610
      %v613 = vmul.f32 %v607, %v601
      %v614 = vmul.f32 %v607, %v602
      %v615 = vmul.f32 %v611, %v603
      %v616 = vmul.f32 %v611, %v604
      %v617 = vadd.f32 %v571, %v613
      %v618 = vadd.f32 %v572, %v614
      %v619 = vadd.f32 %v573, %v615
      %v620 = vadd.f32 %v574, %v616
      %s621 = scalar_lea.vmem %s4, 4
      %v622 = vld [vmem:[%s621] ss:$8 sm:$0x3]
      %v624 = vlaneseq
      %v625 = vshrl.u32 %v624, 7
      %v626 = vsub.s32 0, %v625
      %v627 = vrot.slane %v622, %v626
      %v628 = vlaneseq
      %v629 = vshrl.u32 %v628, 7
      %v630 = vsub.s32 1, %v629
      %v631 = vrot.slane %v622, %v630
      %v634 = vmul.f32 %v627, %v428
      %v635 = vmul.f32 %v631, %v429
      %v636 = vmul.f32 %v627, %v430
      %v637 = vmul.f32 %v631, %v431
      %638 = vset.pattern.permute.xlu0 4
      %639 = vperm.xlu0 %638, %v432
      %v640 = vpop.permute.xlu0 %639
      %642 = vset.pattern.permute.xlu0 4
      %643 = vperm.xlu0 %642, %v433
      %v644 = vpop.permute.xlu0 %643
      %v646 = vmul.f32 %v640, %v634
      %v647 = vmul.f32 %v640, %v635
      %v648 = vmul.f32 %v644, %v636
      %v649 = vmul.f32 %v644, %v637
      %v650 = vadd.f32 %v617, %v646
      %v651 = vadd.f32 %v618, %v647
      %v652 = vadd.f32 %v619, %v648
      %v653 = vadd.f32 %v620, %v649
      %654 = vrot.lane.b32.xlu0 %v428, 127
      %v655 = vpop.permute.xlu0 %654
      %656 = vrot.lane.b32.xlu0 %v430, 127
      %v657 = vpop.permute.xlu0 %656
      %658 = vrot.lane.b32.xlu0 %v429, 127
      %v659 = vpop.permute.xlu0 %658
      %660 = vrot.lane.b32.xlu0 %v431, 127
      %v661 = vpop.permute.xlu0 %660
      %vm662 = vcmp.lt.s32.totalorder %v443, 127
      %v663 = vsel %vm662, %v655, %v659
      %v664 = vsel %vm662, %v657, %v661
      %v665 = vsel %vm662, %v659, %v655
      %v666 = vsel %vm662, %v661, %v657
      %s667 = scalar_lea.vmem %s4, 5
      %v668 = vld [vmem:[%s667] ss:$8 sm:$0x3]
      %v670 = vlaneseq
      %v671 = vshrl.u32 %v670, 7
      %v672 = vsub.s32 0, %v671
      %v673 = vrot.slane %v668, %v672
      %v674 = vlaneseq
      %v675 = vshrl.u32 %v674, 7
      %v676 = vsub.s32 1, %v675
      %v677 = vrot.slane %v668, %v676
      %v680 = vmul.f32 %v673, %v663
      %v681 = vmul.f32 %v677, %v665
      %v682 = vmul.f32 %v673, %v664
      %v683 = vmul.f32 %v677, %v666
      %684 = vset.pattern.permute.xlu0 5
      %685 = vperm.xlu0 %684, %v432
      %v686 = vpop.permute.xlu0 %685
      %688 = vset.pattern.permute.xlu0 5
      %689 = vperm.xlu0 %688, %v433
      %v690 = vpop.permute.xlu0 %689
      %v692 = vmul.f32 %v686, %v680
      %v693 = vmul.f32 %v686, %v681
      %v694 = vmul.f32 %v690, %v682
      %v695 = vmul.f32 %v690, %v683
      %v696 = vadd.f32 %v650, %v692
      %v697 = vadd.f32 %v651, %v693
      %v698 = vadd.f32 %v652, %v694
      %v699 = vadd.f32 %v653, %v695
      %700 = vrot.lane.b32.xlu0 %v428, 113
      %v701 = vpop.permute.xlu0 %700
      %702 = vrot.lane.b32.xlu0 %v430, 113
      %v703 = vpop.permute.xlu0 %702
      %704 = vrot.lane.b32.xlu0 %v429, 113
      %v705 = vpop.permute.xlu0 %704
      %706 = vrot.lane.b32.xlu0 %v431, 113
      %v707 = vpop.permute.xlu0 %706
      %vm708 = vcmp.lt.s32.totalorder %v443, 113
      %v709 = vsel %vm708, %v701, %v705
      %v710 = vsel %vm708, %v703, %v707
      %v711 = vsel %vm708, %v705, %v701
      %v712 = vsel %vm708, %v707, %v703
      %s713 = scalar_lea.vmem %s4, 6
      %v714 = vld [vmem:[%s713] ss:$8 sm:$0x3]
      %v716 = vlaneseq
      %v717 = vshrl.u32 %v716, 7
      %v718 = vsub.s32 0, %v717
      %v719 = vrot.slane %v714, %v718
      %v720 = vlaneseq
      %v721 = vshrl.u32 %v720, 7
      %v722 = vsub.s32 1, %v721
      %v723 = vrot.slane %v714, %v722
      %v726 = vmul.f32 %v719, %v709
      %v727 = vmul.f32 %v723, %v711
      %v728 = vmul.f32 %v719, %v710
      %v729 = vmul.f32 %v723, %v712
      %730 = vset.pattern.permute.xlu0 6
      %731 = vperm.xlu0 %730, %v432
      %v732 = vpop.permute.xlu0 %731
      %734 = vset.pattern.permute.xlu0 6
      %735 = vperm.xlu0 %734, %v433
      %v736 = vpop.permute.xlu0 %735
      %v738 = vmul.f32 %v732, %v726
      %v739 = vmul.f32 %v732, %v727
      %v740 = vmul.f32 %v736, %v728
      %v741 = vmul.f32 %v736, %v729
      %v742 = vadd.f32 %v696, %v738
      %v743 = vadd.f32 %v697, %v739
      %v744 = vadd.f32 %v698, %v740
      %v745 = vadd.f32 %v699, %v741
      %746 = vrot.lane.b32.xlu0 %v428, 112
      %v747 = vpop.permute.xlu0 %746
      %748 = vrot.lane.b32.xlu0 %v430, 112
      %v749 = vpop.permute.xlu0 %748
      %750 = vrot.lane.b32.xlu0 %v429, 112
      %v751 = vpop.permute.xlu0 %750
      %752 = vrot.lane.b32.xlu0 %v431, 112
      %v753 = vpop.permute.xlu0 %752
      %vm754 = vcmp.lt.s32.totalorder %v443, 112
      %v755 = vsel %vm754, %v747, %v751
      %v756 = vsel %vm754, %v749, %v753
      %v757 = vsel %vm754, %v751, %v747
      %v758 = vsel %vm754, %v753, %v749
      %s759 = scalar_lea.vmem %s4, 7
      %v760 = vld [vmem:[%s759] ss:$8 sm:$0x3]
      %v762 = vlaneseq
      %v763 = vshrl.u32 %v762, 7
      %v764 = vsub.s32 0, %v763
      %v765 = vrot.slane %v760, %v764
      %v766 = vlaneseq
      %v767 = vshrl.u32 %v766, 7
      %v768 = vsub.s32 1, %v767
      %v769 = vrot.slane %v760, %v768
      %v772 = vmul.f32 %v765, %v755
      %v773 = vmul.f32 %v769, %v757
      %v774 = vmul.f32 %v765, %v756
      %v775 = vmul.f32 %v769, %v758
      %776 = vset.pattern.permute.xlu0 7
      %777 = vperm.xlu0 %776, %v432
      %v778 = vpop.permute.xlu0 %777
      %780 = vset.pattern.permute.xlu0 7
      %781 = vperm.xlu0 %780, %v433
      %v782 = vpop.permute.xlu0 %781
      %v784 = vmul.f32 %v778, %v772
      %v785 = vmul.f32 %v778, %v773
      %v786 = vmul.f32 %v782, %v774
      %v787 = vmul.f32 %v782, %v775
      %v788 = vadd.f32 %v742, %v784
      %v789 = vadd.f32 %v743, %v785
      %v790 = vadd.f32 %v744, %v786
      %v791 = vadd.f32 %v745, %v787
      %792 = vrot.lane.b32.xlu0 %v428, 111
      %v793 = vpop.permute.xlu0 %792
      %794 = vrot.lane.b32.xlu0 %v430, 111
      %v795 = vpop.permute.xlu0 %794
      %796 = vrot.lane.b32.xlu0 %v429, 111
      %v797 = vpop.permute.xlu0 %796
      %798 = vrot.lane.b32.xlu0 %v431, 111
      %v799 = vpop.permute.xlu0 %798
      %vm800 = vcmp.lt.s32.totalorder %v443, 111
      %v801 = vsel %vm800, %v793, %v797
      %v802 = vsel %vm800, %v795, %v799
      %v803 = vsel %vm800, %v797, %v793
      %v804 = vsel %vm800, %v799, %v795
      %s805 = scalar_lea.vmem %s4, 16
      %v806 = vld [vmem:[%s805] ss:$8 sm:$0x3]
      %v808 = vlaneseq
      %v809 = vshrl.u32 %v808, 7
      %v810 = vsub.s32 0, %v809
      %v811 = vrot.slane %v806, %v810
      %v812 = vlaneseq
      %v813 = vshrl.u32 %v812, 7
      %v814 = vsub.s32 1, %v813
      %v815 = vrot.slane %v806, %v814
      %v818 = vmul.f32 %v811, %v801
      %v819 = vmul.f32 %v815, %v803
      %v820 = vmul.f32 %v811, %v802
      %v821 = vmul.f32 %v815, %v804
      %822 = vset.pattern.permute.xlu0 8
      %823 = vperm.xlu0 %822, %v432
      %v824 = vpop.permute.xlu0 %823
      %826 = vset.pattern.permute.xlu0 8
      %827 = vperm.xlu0 %826, %v433
      %v828 = vpop.permute.xlu0 %827
      %v830 = vmul.f32 %v824, %v818
      %v831 = vmul.f32 %v824, %v819
      %v832 = vmul.f32 %v828, %v820
      %v833 = vmul.f32 %v828, %v821
      %v834 = vadd.f32 %v788, %v830
      %v835 = vadd.f32 %v789, %v831
      %v836 = vadd.f32 %v790, %v832
      %v837 = vadd.f32 %v791, %v833
      %838 = vrot.lane.b32.xlu0 %v428, 34
      %v839 = vpop.permute.xlu0 %838
      %840 = vrot.lane.b32.xlu0 %v430, 34
      %v841 = vpop.permute.xlu0 %840
      %842 = vrot.lane.b32.xlu0 %v429, 34
      %v843 = vpop.permute.xlu0 %842
      %844 = vrot.lane.b32.xlu0 %v431, 34
      %v845 = vpop.permute.xlu0 %844
      %vm846 = vcmp.lt.s32.totalorder %v443, 34
      %v847 = vsel %vm846, %v839, %v843
      %v848 = vsel %vm846, %v841, %v845
      %v849 = vsel %vm846, %v843, %v839
      %v850 = vsel %vm846, %v845, %v841
      %s851 = scalar_lea.vmem %s4, 17
      %v852 = vld [vmem:[%s851] ss:$8 sm:$0x3]
      %v854 = vlaneseq
      %v855 = vshrl.u32 %v854, 7
      %v856 = vsub.s32 0, %v855
      %v857 = vrot.slane %v852, %v856
      %v858 = vlaneseq
      %v859 = vshrl.u32 %v858, 7
      %v860 = vsub.s32 1, %v859
      %v861 = vrot.slane %v852, %v860
      %v864 = vmul.f32 %v857, %v849
      %v865 = vmul.f32 %v861, %v847
      %v866 = vmul.f32 %v857, %v850
      %v867 = vmul.f32 %v861, %v848
      %868 = vset.pattern.permute.xlu0 9
      %869 = vperm.xlu0 %868, %v432
      %v870 = vpop.permute.xlu0 %869
      %872 = vset.pattern.permute.xlu0 9
      %873 = vperm.xlu0 %872, %v433
      %v874 = vpop.permute.xlu0 %873
      %v876 = vmul.f32 %v870, %v864
      %v877 = vmul.f32 %v870, %v865
      %v878 = vmul.f32 %v874, %v866
      %v879 = vmul.f32 %v874, %v867
      %v880 = vadd.f32 %v834, %v876
      %v881 = vadd.f32 %v835, %v877
      %v882 = vadd.f32 %v836, %v878
      %v883 = vadd.f32 %v837, %v879
      %884 = vrot.lane.b32.xlu0 %v428, 32
      %v885 = vpop.permute.xlu0 %884
      %886 = vrot.lane.b32.xlu0 %v430, 32
      %v887 = vpop.permute.xlu0 %886
      %888 = vrot.lane.b32.xlu0 %v429, 32
      %v889 = vpop.permute.xlu0 %888
      %890 = vrot.lane.b32.xlu0 %v431, 32
      %v891 = vpop.permute.xlu0 %890
      %vm892 = vcmp.lt.s32.totalorder %v443, 32
      %v893 = vsel %vm892, %v885, %v889
      %v894 = vsel %vm892, %v887, %v891
      %v895 = vsel %vm892, %v889, %v885
      %v896 = vsel %vm892, %v891, %v887
      %s897 = scalar_lea.vmem %s4, 18
      %v898 = vld [vmem:[%s897] ss:$8 sm:$0x3]
      %v900 = vlaneseq
      %v901 = vshrl.u32 %v900, 7
      %v902 = vsub.s32 0, %v901
      %v903 = vrot.slane %v898, %v902
      %v904 = vlaneseq
      %v905 = vshrl.u32 %v904, 7
      %v906 = vsub.s32 1, %v905
      %v907 = vrot.slane %v898, %v906
      %v910 = vmul.f32 %v903, %v895
      %v911 = vmul.f32 %v907, %v893
      %v912 = vmul.f32 %v903, %v896
      %v913 = vmul.f32 %v907, %v894
      %914 = vset.pattern.permute.xlu0 10
      %915 = vperm.xlu0 %914, %v432
      %v916 = vpop.permute.xlu0 %915
      %918 = vset.pattern.permute.xlu0 10
      %919 = vperm.xlu0 %918, %v433
      %v920 = vpop.permute.xlu0 %919
      %v922 = vmul.f32 %v916, %v910
      %v923 = vmul.f32 %v916, %v911
      %v924 = vmul.f32 %v920, %v912
      %v925 = vmul.f32 %v920, %v913
      %v926 = vadd.f32 %v880, %v922
      %v927 = vadd.f32 %v881, %v923
      %v928 = vadd.f32 %v882, %v924
      %v929 = vadd.f32 %v883, %v925
      %930 = vrot.lane.b32.xlu0 %v428, 30
      %v931 = vpop.permute.xlu0 %930
      %932 = vrot.lane.b32.xlu0 %v430, 30
      %v933 = vpop.permute.xlu0 %932
      %934 = vrot.lane.b32.xlu0 %v429, 30
      %v935 = vpop.permute.xlu0 %934
      %936 = vrot.lane.b32.xlu0 %v431, 30
      %v937 = vpop.permute.xlu0 %936
      %vm938 = vcmp.lt.s32.totalorder %v443, 30
      %v939 = vsel %vm938, %v931, %v935
      %v940 = vsel %vm938, %v933, %v937
      %v941 = vsel %vm938, %v935, %v931
      %v942 = vsel %vm938, %v937, %v933
      %s943 = scalar_lea.vmem %s4, 19
      %v944 = vld [vmem:[%s943] ss:$8 sm:$0x3]
      %v946 = vlaneseq
      %v947 = vshrl.u32 %v946, 7
      %v948 = vsub.s32 0, %v947
      %v949 = vrot.slane %v944, %v948
      %v950 = vlaneseq
      %v951 = vshrl.u32 %v950, 7
      %v952 = vsub.s32 1, %v951
      %v953 = vrot.slane %v944, %v952
      %v956 = vmul.f32 %v949, %v941
      %v957 = vmul.f32 %v953, %v939
      %v958 = vmul.f32 %v949, %v942
      %v959 = vmul.f32 %v953, %v940
      %960 = vset.pattern.permute.xlu0 11
      %961 = vperm.xlu0 %960, %v432
      %v962 = vpop.permute.xlu0 %961
      %964 = vset.pattern.permute.xlu0 11
      %965 = vperm.xlu0 %964, %v433
      %v966 = vpop.permute.xlu0 %965
      %v968 = vmul.f32 %v962, %v956
      %v969 = vmul.f32 %v962, %v957
      %v970 = vmul.f32 %v966, %v958
      %v971 = vmul.f32 %v966, %v959
      %v972 = vadd.f32 %v926, %v968
      %v973 = vadd.f32 %v927, %v969
      %v974 = vadd.f32 %v928, %v970
      %v975 = vadd.f32 %v929, %v971
      %976 = vrot.lane.b32.xlu0 %v428, 2
      %v977 = vpop.permute.xlu0 %976
      %978 = vrot.lane.b32.xlu0 %v430, 2
      %v979 = vpop.permute.xlu0 %978
      %980 = vrot.lane.b32.xlu0 %v429, 2
      %v981 = vpop.permute.xlu0 %980
      %982 = vrot.lane.b32.xlu0 %v431, 2
      %v983 = vpop.permute.xlu0 %982
      %vm984 = vcmp.lt.s32.totalorder %v443, 2
      %v985 = vsel %vm984, %v977, %v981
      %v986 = vsel %vm984, %v979, %v983
      %v987 = vsel %vm984, %v981, %v977
      %v988 = vsel %vm984, %v983, %v979
      %s989 = scalar_lea.vmem %s4, 20
      %v990 = vld [vmem:[%s989] ss:$8 sm:$0x3]
      %v992 = vlaneseq
      %v993 = vshrl.u32 %v992, 7
      %v994 = vsub.s32 0, %v993
      %v995 = vrot.slane %v990, %v994
      %v996 = vlaneseq
      %v997 = vshrl.u32 %v996, 7
      %v998 = vsub.s32 1, %v997
      %v999 = vrot.slane %v990, %v998
      %v1002 = vmul.f32 %v995, %v987
      %v1003 = vmul.f32 %v999, %v985
      %v1004 = vmul.f32 %v995, %v988
      %v1005 = vmul.f32 %v999, %v986
      %1006 = vset.pattern.permute.xlu0 12
      %1007 = vperm.xlu0 %1006, %v432
      %v1008 = vpop.permute.xlu0 %1007
      %1010 = vset.pattern.permute.xlu0 12
      %1011 = vperm.xlu0 %1010, %v433
      %v1012 = vpop.permute.xlu0 %1011
      %v1014 = vmul.f32 %v1008, %v1002
      %v1015 = vmul.f32 %v1008, %v1003
      %v1016 = vmul.f32 %v1012, %v1004
      %v1017 = vmul.f32 %v1012, %v1005
      %v1018 = vadd.f32 %v972, %v1014
      %v1019 = vadd.f32 %v973, %v1015
      %v1020 = vadd.f32 %v974, %v1016
      %v1021 = vadd.f32 %v975, %v1017
      %s1022 = scalar_lea.vmem %s4, 21
      %v1023 = vld [vmem:[%s1022] ss:$8 sm:$0x3]
      %v1025 = vlaneseq
      %v1026 = vshrl.u32 %v1025, 7
      %v1027 = vsub.s32 0, %v1026
      %v1028 = vrot.slane %v1023, %v1027
      %v1029 = vlaneseq
      %v1030 = vshrl.u32 %v1029, 7
      %v1031 = vsub.s32 1, %v1030
      %v1032 = vrot.slane %v1023, %v1031
      %v1035 = vmul.f32 %v1028, %v428
      %v1036 = vmul.f32 %v1032, %v429
      %v1037 = vmul.f32 %v1028, %v430
      %v1038 = vmul.f32 %v1032, %v431
      %1039 = vset.pattern.permute.xlu0 13
      %1040 = vperm.xlu0 %1039, %v432
      %v1041 = vpop.permute.xlu0 %1040
      %1043 = vset.pattern.permute.xlu0 13
      %1044 = vperm.xlu0 %1043, %v433
      %v1045 = vpop.permute.xlu0 %1044
      %v1047 = vmul.f32 %v1041, %v1035
      %v1048 = vmul.f32 %v1041, %v1036
      %v1049 = vmul.f32 %v1045, %v1037
      %v1050 = vmul.f32 %v1045, %v1038
      %v1051 = vadd.f32 %v1018, %v1047
      %v1052 = vadd.f32 %v1019, %v1048
      %v1053 = vadd.f32 %v1020, %v1049
      %v1054 = vadd.f32 %v1021, %v1050
      %1055 = vrot.lane.b32.xlu0 %v428, 126
      %v1056 = vpop.permute.xlu0 %1055
      %1057 = vrot.lane.b32.xlu0 %v430, 126
      %v1058 = vpop.permute.xlu0 %1057
      %1059 = vrot.lane.b32.xlu0 %v429, 126
      %v1060 = vpop.permute.xlu0 %1059
      %1061 = vrot.lane.b32.xlu0 %v431, 126
      %v1062 = vpop.permute.xlu0 %1061
      %vm1063 = vcmp.lt.s32.totalorder %v443, 126
      %v1064 = vsel %vm1063, %v1056, %v1060
      %v1065 = vsel %vm1063, %v1058, %v1062
      %v1066 = vsel %vm1063, %v1060, %v1056
      %v1067 = vsel %vm1063, %v1062, %v1058
      %s1068 = scalar_lea.vmem %s4, 22
      %v1069 = vld [vmem:[%s1068] ss:$8 sm:$0x3]
      %v1071 = vlaneseq
      %v1072 = vshrl.u32 %v1071, 7
      %v1073 = vsub.s32 0, %v1072
      %v1074 = vrot.slane %v1069, %v1073
      %v1075 = vlaneseq
      %v1076 = vshrl.u32 %v1075, 7
      %v1077 = vsub.s32 1, %v1076
      %v1078 = vrot.slane %v1069, %v1077
      %v1081 = vmul.f32 %v1074, %v1064
      %v1082 = vmul.f32 %v1078, %v1066
      %v1083 = vmul.f32 %v1074, %v1065
      %v1084 = vmul.f32 %v1078, %v1067
      %1085 = vset.pattern.permute.xlu0 14
      %1086 = vperm.xlu0 %1085, %v432
      %v1087 = vpop.permute.xlu0 %1086
      %1089 = vset.pattern.permute.xlu0 14
      %1090 = vperm.xlu0 %1089, %v433
      %v1091 = vpop.permute.xlu0 %1090
      %v1093 = vmul.f32 %v1087, %v1081
      %v1094 = vmul.f32 %v1087, %v1082
      %v1095 = vmul.f32 %v1091, %v1083
      %v1096 = vmul.f32 %v1091, %v1084
      %v1097 = vadd.f32 %v1051, %v1093
      %v1098 = vadd.f32 %v1052, %v1094
      %v1099 = vadd.f32 %v1053, %v1095
      %v1100 = vadd.f32 %v1054, %v1096
      %1101 = vrot.lane.b32.xlu0 %v428, 98
      %v1102 = vpop.permute.xlu0 %1101
      %1103 = vrot.lane.b32.xlu0 %v430, 98
      %v1104 = vpop.permute.xlu0 %1103
      %1105 = vrot.lane.b32.xlu0 %v429, 98
      %v1106 = vpop.permute.xlu0 %1105
      %1107 = vrot.lane.b32.xlu0 %v431, 98
      %v1108 = vpop.permute.xlu0 %1107
      %vm1109 = vcmp.lt.s32.totalorder %v443, 98
      %v1110 = vsel %vm1109, %v1102, %v1106
      %v1111 = vsel %vm1109, %v1104, %v1108
      %v1112 = vsel %vm1109, %v1106, %v1102
      %v1113 = vsel %vm1109, %v1108, %v1104
      %s1114 = scalar_lea.vmem %s4, 23
      %v1115 = vld [vmem:[%s1114] ss:$8 sm:$0x3]
      %v1117 = vlaneseq
      %v1118 = vshrl.u32 %v1117, 7
      %v1119 = vsub.s32 0, %v1118
      %v1120 = vrot.slane %v1115, %v1119
      %v1121 = vlaneseq
      %v1122 = vshrl.u32 %v1121, 7
      %v1123 = vsub.s32 1, %v1122
      %v1124 = vrot.slane %v1115, %v1123
      %v1127 = vmul.f32 %v1120, %v1110
      %v1128 = vmul.f32 %v1124, %v1112
      %v1129 = vmul.f32 %v1120, %v1111
      %v1130 = vmul.f32 %v1124, %v1113
      %1131 = vset.pattern.permute.xlu0 15
      %1132 = vperm.xlu0 %1131, %v432
      %v1133 = vpop.permute.xlu0 %1132
      %1135 = vset.pattern.permute.xlu0 15
      %1136 = vperm.xlu0 %1135, %v433
      %v1137 = vpop.permute.xlu0 %1136
      %v1139 = vmul.f32 %v1133, %v1127
      %v1140 = vmul.f32 %v1133, %v1128
      %v1141 = vmul.f32 %v1137, %v1129
      %v1142 = vmul.f32 %v1137, %v1130
      %v1143 = vadd.f32 %v1097, %v1139
      %v1144 = vadd.f32 %v1098, %v1140
      %v1145 = vadd.f32 %v1099, %v1141
      %v1146 = vadd.f32 %v1100, %v1142
      %1147 = vrot.lane.b32.xlu0 %v428, 96
      %v1148 = vpop.permute.xlu0 %1147
      %1149 = vrot.lane.b32.xlu0 %v430, 96
      %v1150 = vpop.permute.xlu0 %1149
      %1151 = vrot.lane.b32.xlu0 %v429, 96
      %v1152 = vpop.permute.xlu0 %1151
      %1153 = vrot.lane.b32.xlu0 %v431, 96
      %v1154 = vpop.permute.xlu0 %1153
      %vm1155 = vcmp.lt.s32.totalorder %v443, 96
      %v1156 = vsel %vm1155, %v1148, %v1152
      %v1157 = vsel %vm1155, %v1150, %v1154
      %v1158 = vsel %vm1155, %v1152, %v1148
      %v1159 = vsel %vm1155, %v1154, %v1150
      %s1160 = scalar_lea.vmem %s4, 32
      %v1161 = vld [vmem:[%s1160] ss:$8 sm:$0x3]
      %v1163 = vlaneseq
      %v1164 = vshrl.u32 %v1163, 7
      %v1165 = vsub.s32 0, %v1164
      %v1166 = vrot.slane %v1161, %v1165
      %v1167 = vlaneseq
      %v1168 = vshrl.u32 %v1167, 7
      %v1169 = vsub.s32 1, %v1168
      %v1170 = vrot.slane %v1161, %v1169
      %v1173 = vmul.f32 %v1166, %v1156
      %v1174 = vmul.f32 %v1170, %v1158
      %v1175 = vmul.f32 %v1166, %v1157
      %v1176 = vmul.f32 %v1170, %v1159
      %1177 = vset.pattern.permute.xlu0 16
      %1178 = vperm.xlu0 %1177, %v432
      %v1179 = vpop.permute.xlu0 %1178
      %1181 = vset.pattern.permute.xlu0 16
      %1182 = vperm.xlu0 %1181, %v433
      %v1183 = vpop.permute.xlu0 %1182
      %v1185 = vmul.f32 %v1179, %v1173
      %v1186 = vmul.f32 %v1179, %v1174
      %v1187 = vmul.f32 %v1183, %v1175
      %v1188 = vmul.f32 %v1183, %v1176
      %v1189 = vadd.f32 %v1143, %v1185
      %v1190 = vadd.f32 %v1144, %v1186
      %v1191 = vadd.f32 %v1145, %v1187
      %v1192 = vadd.f32 %v1146, %v1188
      %1193 = vrot.lane.b32.xlu0 %v428, 94
      %v1194 = vpop.permute.xlu0 %1193
      %1195 = vrot.lane.b32.xlu0 %v430, 94
      %v1196 = vpop.permute.xlu0 %1195
      %1197 = vrot.lane.b32.xlu0 %v429, 94
      %v1198 = vpop.permute.xlu0 %1197
      %1199 = vrot.lane.b32.xlu0 %v431, 94
      %v1200 = vpop.permute.xlu0 %1199
      %vm1201 = vcmp.lt.s32.totalorder %v443, 94
      %v1202 = vsel %vm1201, %v1194, %v1198
      %v1203 = vsel %vm1201, %v1196, %v1200
      %v1204 = vsel %vm1201, %v1198, %v1194
      %v1205 = vsel %vm1201, %v1200, %v1196
      %s1206 = scalar_lea.vmem %s4, 33
      %v1207 = vld [vmem:[%s1206] ss:$8 sm:$0x3]
      %v1209 = vlaneseq
      %v1210 = vshrl.u32 %v1209, 7
      %v1211 = vsub.s32 0, %v1210
      %v1212 = vrot.slane %v1207, %v1211
      %v1213 = vlaneseq
      %v1214 = vshrl.u32 %v1213, 7
      %v1215 = vsub.s32 1, %v1214
      %v1216 = vrot.slane %v1207, %v1215
      %v1219 = vmul.f32 %v1212, %v1202
      %v1220 = vmul.f32 %v1216, %v1204
      %v1221 = vmul.f32 %v1212, %v1203
      %v1222 = vmul.f32 %v1216, %v1205
      %1223 = vset.pattern.permute.xlu0 17
      %1224 = vperm.xlu0 %1223, %v432
      %v1225 = vpop.permute.xlu0 %1224
      %1227 = vset.pattern.permute.xlu0 17
      %1228 = vperm.xlu0 %1227, %v433
      %v1229 = vpop.permute.xlu0 %1228
      %v1231 = vmul.f32 %v1225, %v1219
      %v1232 = vmul.f32 %v1225, %v1220
      %v1233 = vmul.f32 %v1229, %v1221
      %v1234 = vmul.f32 %v1229, %v1222
      %v1235 = vadd.f32 %v1189, %v1231
      %v1236 = vadd.f32 %v1190, %v1232
      %v1237 = vadd.f32 %v1191, %v1233
      %v1238 = vadd.f32 %v1192, %v1234
      %1239 = vrot.lane.b32.xlu0 %v428, 51
      %v1240 = vpop.permute.xlu0 %1239
      %1241 = vrot.lane.b32.xlu0 %v430, 51
      %v1242 = vpop.permute.xlu0 %1241
      %1243 = vrot.lane.b32.xlu0 %v429, 51
      %v1244 = vpop.permute.xlu0 %1243
      %1245 = vrot.lane.b32.xlu0 %v431, 51
      %v1246 = vpop.permute.xlu0 %1245
      %vm1247 = vcmp.lt.s32.totalorder %v443, 51
      %v1248 = vsel %vm1247, %v1240, %v1244
      %v1249 = vsel %vm1247, %v1242, %v1246
      %v1250 = vsel %vm1247, %v1244, %v1240
      %v1251 = vsel %vm1247, %v1246, %v1242
      %s1252 = scalar_lea.vmem %s4, 34
      %v1253 = vld [vmem:[%s1252] ss:$8 sm:$0x3]
      %v1255 = vlaneseq
      %v1256 = vshrl.u32 %v1255, 7
      %v1257 = vsub.s32 0, %v1256
      %v1258 = vrot.slane %v1253, %v1257
      %v1259 = vlaneseq
      %v1260 = vshrl.u32 %v1259, 7
      %v1261 = vsub.s32 1, %v1260
      %v1262 = vrot.slane %v1253, %v1261
      %v1265 = vmul.f32 %v1258, %v1250
      %v1266 = vmul.f32 %v1262, %v1248
      %v1267 = vmul.f32 %v1258, %v1251
      %v1268 = vmul.f32 %v1262, %v1249
      %1269 = vset.pattern.permute.xlu0 18
      %1270 = vperm.xlu0 %1269, %v432
      %v1271 = vpop.permute.xlu0 %1270
      %1273 = vset.pattern.permute.xlu0 18
      %1274 = vperm.xlu0 %1273, %v433
      %v1275 = vpop.permute.xlu0 %1274
      %v1277 = vmul.f32 %v1271, %v1265
      %v1278 = vmul.f32 %v1271, %v1266
      %v1279 = vmul.f32 %v1275, %v1267
      %v1280 = vmul.f32 %v1275, %v1268
      %v1281 = vadd.f32 %v1235, %v1277
      %v1282 = vadd.f32 %v1236, %v1278
      %v1283 = vadd.f32 %v1237, %v1279
      %v1284 = vadd.f32 %v1238, %v1280
      %1285 = vrot.lane.b32.xlu0 %v428, 48
      %v1286 = vpop.permute.xlu0 %1285
      %1287 = vrot.lane.b32.xlu0 %v430, 48
      %v1288 = vpop.permute.xlu0 %1287
      %1289 = vrot.lane.b32.xlu0 %v429, 48
      %v1290 = vpop.permute.xlu0 %1289
      %1291 = vrot.lane.b32.xlu0 %v431, 48
      %v1292 = vpop.permute.xlu0 %1291
      %vm1293 = vcmp.lt.s32.totalorder %v443, 48
      %v1294 = vsel %vm1293, %v1286, %v1290
      %v1295 = vsel %vm1293, %v1288, %v1292
      %v1296 = vsel %vm1293, %v1290, %v1286
      %v1297 = vsel %vm1293, %v1292, %v1288
      %s1298 = scalar_lea.vmem %s4, 35
      %v1299 = vld [vmem:[%s1298] ss:$8 sm:$0x3]
      %v1301 = vlaneseq
      %v1302 = vshrl.u32 %v1301, 7
      %v1303 = vsub.s32 0, %v1302
      %v1304 = vrot.slane %v1299, %v1303
      %v1305 = vlaneseq
      %v1306 = vshrl.u32 %v1305, 7
      %v1307 = vsub.s32 1, %v1306
      %v1308 = vrot.slane %v1299, %v1307
      %v1311 = vmul.f32 %v1304, %v1296
      %v1312 = vmul.f32 %v1308, %v1294
      %v1313 = vmul.f32 %v1304, %v1297
      %v1314 = vmul.f32 %v1308, %v1295
      %1315 = vset.pattern.permute.xlu0 19
      %1316 = vperm.xlu0 %1315, %v432
      %v1317 = vpop.permute.xlu0 %1316
      %1319 = vset.pattern.permute.xlu0 19
      %1320 = vperm.xlu0 %1319, %v433
      %v1321 = vpop.permute.xlu0 %1320
      %v1323 = vmul.f32 %v1317, %v1311
      %v1324 = vmul.f32 %v1317, %v1312
      %v1325 = vmul.f32 %v1321, %v1313
      %v1326 = vmul.f32 %v1321, %v1314
      %v1327 = vadd.f32 %v1281, %v1323
      %v1328 = vadd.f32 %v1282, %v1324
      %v1329 = vadd.f32 %v1283, %v1325
      %v1330 = vadd.f32 %v1284, %v1326
      %1331 = vrot.lane.b32.xlu0 %v428, 45
      %v1332 = vpop.permute.xlu0 %1331
      %1333 = vrot.lane.b32.xlu0 %v430, 45
      %v1334 = vpop.permute.xlu0 %1333
      %1335 = vrot.lane.b32.xlu0 %v429, 45
      %v1336 = vpop.permute.xlu0 %1335
      %1337 = vrot.lane.b32.xlu0 %v431, 45
      %v1338 = vpop.permute.xlu0 %1337
      %vm1339 = vcmp.lt.s32.totalorder %v443, 45
      %v1340 = vsel %vm1339, %v1332, %v1336
      %v1341 = vsel %vm1339, %v1334, %v1338
      %v1342 = vsel %vm1339, %v1336, %v1332
      %v1343 = vsel %vm1339, %v1338, %v1334
      %s1344 = scalar_lea.vmem %s4, 36
      %v1345 = vld [vmem:[%s1344] ss:$8 sm:$0x3]
      %v1347 = vlaneseq
      %v1348 = vshrl.u32 %v1347, 7
      %v1349 = vsub.s32 0, %v1348
      %v1350 = vrot.slane %v1345, %v1349
      %v1351 = vlaneseq
      %v1352 = vshrl.u32 %v1351, 7
      %v1353 = vsub.s32 1, %v1352
      %v1354 = vrot.slane %v1345, %v1353
      %v1357 = vmul.f32 %v1350, %v1342
      %v1358 = vmul.f32 %v1354, %v1340
      %v1359 = vmul.f32 %v1350, %v1343
      %v1360 = vmul.f32 %v1354, %v1341
      %1361 = vset.pattern.permute.xlu0 20
      %1362 = vperm.xlu0 %1361, %v432
      %v1363 = vpop.permute.xlu0 %1362
      %1365 = vset.pattern.permute.xlu0 20
      %1366 = vperm.xlu0 %1365, %v433
      %v1367 = vpop.permute.xlu0 %1366
      %v1369 = vmul.f32 %v1363, %v1357
      %v1370 = vmul.f32 %v1363, %v1358
      %v1371 = vmul.f32 %v1367, %v1359
      %v1372 = vmul.f32 %v1367, %v1360
      %v1373 = vadd.f32 %v1327, %v1369
      %v1374 = vadd.f32 %v1328, %v1370
      %v1375 = vadd.f32 %v1329, %v1371
      %v1376 = vadd.f32 %v1330, %v1372
      %1377 = vrot.lane.b32.xlu0 %v428, 3
      %v1378 = vpop.permute.xlu0 %1377
      %1379 = vrot.lane.b32.xlu0 %v430, 3
      %v1380 = vpop.permute.xlu0 %1379
      %1381 = vrot.lane.b32.xlu0 %v429, 3
      %v1382 = vpop.permute.xlu0 %1381
      %1383 = vrot.lane.b32.xlu0 %v431, 3
      %v1384 = vpop.permute.xlu0 %1383
      %vm1385 = vcmp.lt.s32.totalorder %v443, 3
      %v1386 = vsel %vm1385, %v1378, %v1382
      %v1387 = vsel %vm1385, %v1380, %v1384
      %v1388 = vsel %vm1385, %v1382, %v1378
      %v1389 = vsel %vm1385, %v1384, %v1380
      %s1390 = scalar_lea.vmem %s4, 37
      %v1391 = vld [vmem:[%s1390] ss:$8 sm:$0x3]
      %v1393 = vlaneseq
      %v1394 = vshrl.u32 %v1393, 7
      %v1395 = vsub.s32 0, %v1394
      %v1396 = vrot.slane %v1391, %v1395
      %v1397 = vlaneseq
      %v1398 = vshrl.u32 %v1397, 7
      %v1399 = vsub.s32 1, %v1398
      %v1400 = vrot.slane %v1391, %v1399
      %v1403 = vmul.f32 %v1396, %v1388
      %v1404 = vmul.f32 %v1400, %v1386
      %v1405 = vmul.f32 %v1396, %v1389
      %v1406 = vmul.f32 %v1400, %v1387
      %1407 = vset.pattern.permute.xlu0 21
      %1408 = vperm.xlu0 %1407, %v432
      %v1409 = vpop.permute.xlu0 %1408
      %1411 = vset.pattern.permute.xlu0 21
      %1412 = vperm.xlu0 %1411, %v433
      %v1413 = vpop.permute.xlu0 %1412
      %v1415 = vmul.f32 %v1409, %v1403
      %v1416 = vmul.f32 %v1409, %v1404
      %v1417 = vmul.f32 %v1413, %v1405
      %v1418 = vmul.f32 %v1413, %v1406
      %v1419 = vadd.f32 %v1373, %v1415
      %v1420 = vadd.f32 %v1374, %v1416
      %v1421 = vadd.f32 %v1375, %v1417
      %v1422 = vadd.f32 %v1376, %v1418
      %s1423 = scalar_lea.vmem %s4, 38
      %v1424 = vld [vmem:[%s1423] ss:$8 sm:$0x3]
      %v1426 = vlaneseq
      %v1427 = vshrl.u32 %v1426, 7
      %v1428 = vsub.s32 0, %v1427
      %v1429 = vrot.slane %v1424, %v1428
      %v1430 = vlaneseq
      %v1431 = vshrl.u32 %v1430, 7
      %v1432 = vsub.s32 1, %v1431
      %v1433 = vrot.slane %v1424, %v1432
      %v1436 = vmul.f32 %v1429, %v428
      %v1437 = vmul.f32 %v1433, %v429
      %v1438 = vmul.f32 %v1429, %v430
      %v1439 = vmul.f32 %v1433, %v431
      %1440 = vset.pattern.permute.xlu0 22
      %1441 = vperm.xlu0 %1440, %v432
      %v1442 = vpop.permute.xlu0 %1441
      %1444 = vset.pattern.permute.xlu0 22
      %1445 = vperm.xlu0 %1444, %v433
      %v1446 = vpop.permute.xlu0 %1445
      %v1448 = vmul.f32 %v1442, %v1436
      %v1449 = vmul.f32 %v1442, %v1437
      %v1450 = vmul.f32 %v1446, %v1438
      %v1451 = vmul.f32 %v1446, %v1439
      %v1452 = vadd.f32 %v1419, %v1448
      %v1453 = vadd.f32 %v1420, %v1449
      %v1454 = vadd.f32 %v1421, %v1450
      %v1455 = vadd.f32 %v1422, %v1451
      %1456 = vrot.lane.b32.xlu0 %v428, 125
      %v1457 = vpop.permute.xlu0 %1456
      %1458 = vrot.lane.b32.xlu0 %v430, 125
      %v1459 = vpop.permute.xlu0 %1458
      %1460 = vrot.lane.b32.xlu0 %v429, 125
      %v1461 = vpop.permute.xlu0 %1460
      %1462 = vrot.lane.b32.xlu0 %v431, 125
      %v1463 = vpop.permute.xlu0 %1462
      %vm1464 = vcmp.lt.s32.totalorder %v443, 125
      %v1465 = vsel %vm1464, %v1457, %v1461
      %v1466 = vsel %vm1464, %v1459, %v1463
      %v1467 = vsel %vm1464, %v1461, %v1457
      %v1468 = vsel %vm1464, %v1463, %v1459
      %s1469 = scalar_lea.vmem %s4, 39
      %v1470 = vld [vmem:[%s1469] ss:$8 sm:$0x3]
      %v1472 = vlaneseq
      %v1473 = vshrl.u32 %v1472, 7
      %v1474 = vsub.s32 0, %v1473
      %v1475 = vrot.slane %v1470, %v1474
      %v1476 = vlaneseq
      %v1477 = vshrl.u32 %v1476, 7
      %v1478 = vsub.s32 1, %v1477
      %v1479 = vrot.slane %v1470, %v1478
      %v1482 = vmul.f32 %v1475, %v1465
      %v1483 = vmul.f32 %v1479, %v1467
      %v1484 = vmul.f32 %v1475, %v1466
      %v1485 = vmul.f32 %v1479, %v1468
      %1486 = vset.pattern.permute.xlu0 23
      %1487 = vperm.xlu0 %1486, %v432
      %v1488 = vpop.permute.xlu0 %1487
      %1490 = vset.pattern.permute.xlu0 23
      %1491 = vperm.xlu0 %1490, %v433
      %v1492 = vpop.permute.xlu0 %1491
      %v1494 = vmul.f32 %v1488, %v1482
      %v1495 = vmul.f32 %v1488, %v1483
      %v1496 = vmul.f32 %v1492, %v1484
      %v1497 = vmul.f32 %v1492, %v1485
      %v1498 = vadd.f32 %v1452, %v1494
      %v1499 = vadd.f32 %v1453, %v1495
      %v1500 = vadd.f32 %v1454, %v1496
      %v1501 = vadd.f32 %v1455, %v1497
      %1502 = vrot.lane.b32.xlu0 %v428, 83
      %v1503 = vpop.permute.xlu0 %1502
      %1504 = vrot.lane.b32.xlu0 %v430, 83
      %v1505 = vpop.permute.xlu0 %1504
      %1506 = vrot.lane.b32.xlu0 %v429, 83
      %v1507 = vpop.permute.xlu0 %1506
      %1508 = vrot.lane.b32.xlu0 %v431, 83
      %v1509 = vpop.permute.xlu0 %1508
      %vm1510 = vcmp.lt.s32.totalorder %v443, 83
      %v1511 = vsel %vm1510, %v1503, %v1507
      %v1512 = vsel %vm1510, %v1505, %v1509
      %v1513 = vsel %vm1510, %v1507, %v1503
      %v1514 = vsel %vm1510, %v1509, %v1505
      %s1515 = scalar_lea.vmem %s4, 48
      %v1516 = vld [vmem:[%s1515] ss:$8 sm:$0x3]
      %v1518 = vlaneseq
      %v1519 = vshrl.u32 %v1518, 7
      %v1520 = vsub.s32 0, %v1519
      %v1521 = vrot.slane %v1516, %v1520
      %v1522 = vlaneseq
      %v1523 = vshrl.u32 %v1522, 7
      %v1524 = vsub.s32 1, %v1523
      %v1525 = vrot.slane %v1516, %v1524
      %v1528 = vmul.f32 %v1521, %v1511
      %v1529 = vmul.f32 %v1525, %v1513
      %v1530 = vmul.f32 %v1521, %v1512
      %v1531 = vmul.f32 %v1525, %v1514
      %1532 = vset.pattern.permute.xlu0 24
      %1533 = vperm.xlu0 %1532, %v432
      %v1534 = vpop.permute.xlu0 %1533
      %1536 = vset.pattern.permute.xlu0 24
      %1537 = vperm.xlu0 %1536, %v433
      %v1538 = vpop.permute.xlu0 %1537
      %v1540 = vmul.f32 %v1534, %v1528
      %v1541 = vmul.f32 %v1534, %v1529
      %v1542 = vmul.f32 %v1538, %v1530
      %v1543 = vmul.f32 %v1538, %v1531
      %v1544 = vadd.f32 %v1498, %v1540
      %v1545 = vadd.f32 %v1499, %v1541
      %v1546 = vadd.f32 %v1500, %v1542
      %v1547 = vadd.f32 %v1501, %v1543
      %1548 = vrot.lane.b32.xlu0 %v428, 80
      %v1549 = vpop.permute.xlu0 %1548
      %1550 = vrot.lane.b32.xlu0 %v430, 80
      %v1551 = vpop.permute.xlu0 %1550
      %1552 = vrot.lane.b32.xlu0 %v429, 80
      %v1553 = vpop.permute.xlu0 %1552
      %1554 = vrot.lane.b32.xlu0 %v431, 80
      %v1555 = vpop.permute.xlu0 %1554
      %vm1556 = vcmp.lt.s32.totalorder %v443, 80
      %v1557 = vsel %vm1556, %v1549, %v1553
      %v1558 = vsel %vm1556, %v1551, %v1555
      %v1559 = vsel %vm1556, %v1553, %v1549
      %v1560 = vsel %vm1556, %v1555, %v1551
      %s1561 = scalar_lea.vmem %s4, 49
      %v1562 = vld [vmem:[%s1561] ss:$8 sm:$0x3]
      %v1564 = vlaneseq
      %v1565 = vshrl.u32 %v1564, 7
      %v1566 = vsub.s32 0, %v1565
      %v1567 = vrot.slane %v1562, %v1566
      %v1568 = vlaneseq
      %v1569 = vshrl.u32 %v1568, 7
      %v1570 = vsub.s32 1, %v1569
      %v1571 = vrot.slane %v1562, %v1570
      %v1574 = vmul.f32 %v1567, %v1557
      %v1575 = vmul.f32 %v1571, %v1559
      %v1576 = vmul.f32 %v1567, %v1558
      %v1577 = vmul.f32 %v1571, %v1560
      %1578 = vset.pattern.permute.xlu0 25
      %1579 = vperm.xlu0 %1578, %v432
      %v1580 = vpop.permute.xlu0 %1579
      %1582 = vset.pattern.permute.xlu0 25
      %1583 = vperm.xlu0 %1582, %v433
      %v1584 = vpop.permute.xlu0 %1583
      %v1586 = vmul.f32 %v1580, %v1574
      %v1587 = vmul.f32 %v1580, %v1575
      %v1588 = vmul.f32 %v1584, %v1576
      %v1589 = vmul.f32 %v1584, %v1577
      %v1590 = vadd.f32 %v1544, %v1586
      %v1591 = vadd.f32 %v1545, %v1587
      %v1592 = vadd.f32 %v1546, %v1588
      %v1593 = vadd.f32 %v1547, %v1589
      %1594 = vrot.lane.b32.xlu0 %v428, 77
      %v1595 = vpop.permute.xlu0 %1594
      %1596 = vrot.lane.b32.xlu0 %v430, 77
      %v1597 = vpop.permute.xlu0 %1596
      %1598 = vrot.lane.b32.xlu0 %v429, 77
      %v1599 = vpop.permute.xlu0 %1598
      %1600 = vrot.lane.b32.xlu0 %v431, 77
      %v1601 = vpop.permute.xlu0 %1600
      %vm1602 = vcmp.lt.s32.totalorder %v443, 77
      %v1603 = vsel %vm1602, %v1595, %v1599
      %v1604 = vsel %vm1602, %v1597, %v1601
      %v1605 = vsel %vm1602, %v1599, %v1595
      %v1606 = vsel %vm1602, %v1601, %v1597
      %s1607 = scalar_lea.vmem %s4, 50
      %v1608 = vld [vmem:[%s1607] ss:$8 sm:$0x3]
      %v1610 = vlaneseq
      %v1611 = vshrl.u32 %v1610, 7
      %v1612 = vsub.s32 0, %v1611
      %v1613 = vrot.slane %v1608, %v1612
      %v1614 = vlaneseq
      %v1615 = vshrl.u32 %v1614, 7
      %v1616 = vsub.s32 1, %v1615
      %v1617 = vrot.slane %v1608, %v1616
      %v1620 = vmul.f32 %v1613, %v1603
      %v1621 = vmul.f32 %v1617, %v1605
      %v1622 = vmul.f32 %v1613, %v1604
      %v1623 = vmul.f32 %v1617, %v1606
      %1624 = vset.pattern.permute.xlu0 26
      %1625 = vperm.xlu0 %1624, %v432
      %v1626 = vpop.permute.xlu0 %1625
      %1628 = vset.pattern.permute.xlu0 26
      %1629 = vperm.xlu0 %1628, %v433
      %v1630 = vpop.permute.xlu0 %1629
      %v1632 = vmul.f32 %v1626, %v1620
      %v1633 = vmul.f32 %v1626, %v1621
      %v1634 = vmul.f32 %v1630, %v1622
      %v1635 = vmul.f32 %v1630, %v1623
      %v1636 = vadd.f32 %v1590, %v1632
      %v1637 = vadd.f32 %v1591, %v1633
      %v1638 = vadd.f32 %v1592, %v1634
      %v1639 = vadd.f32 %v1593, %v1635
      %v1640 = vld [vmem:[%s5] sm:$0xff]
      %v1641 = vld [vmem:[%s5 + $0x8] sm:$0xff]
      %1643 = vset.pattern.permute.xlu0 0
      %1644 = vperm.xlu0 %1643, %v1640
      %v1645 = vpop.permute.xlu0 %1644
      %1648 = vset.pattern.permute.xlu0 0
      %1649 = vperm.xlu0 %1648, %v1641
      %v1650 = vpop.permute.xlu0 %1649
      %v1652 = vmul.f32 %v1636, %v1645
      %v1653 = vmul.f32 %v1637, %v1645
      %v1654 = vmul.f32 %v1638, %v1650
      %v1655 = vmul.f32 %v1639, %v1650
      %1656 = vset.pattern.permute.xlu0 1
      %1657 = vperm.xlu0 %1656, %v1640
      %v1658 = vpop.permute.xlu0 %1657
      %1660 = vset.pattern.permute.xlu0 1
      %1661 = vperm.xlu0 %1660, %v1641
      %v1662 = vpop.permute.xlu0 %1661
      %v1664 = vadd.f32 %v1652, %v1658
      %v1665 = vadd.f32 %v1653, %v1658
      %v1666 = vadd.f32 %v1654, %v1662
      %v1667 = vadd.f32 %v1655, %v1662
      %v1668 = vmax.f32 %v1664, 0.0
      %v1669 = vmax.f32 %v1665, 0.0
      %v1670 = vmax.f32 %v1666, 0.0
      %v1671 = vmax.f32 %v1667, 0.0
      %v1672 = vld [vmem:[%s7] sm:$0xf]
      %v1673 = vld [vmem:[%s6] sm:$0xf]
      %vm1674 = vcmask 130048
      %v1676 = vsel %vm1674, %v1673, 0
      %1678 = vmatprep.subr.mxu0 0.0
      %1679 = vmatpush1.msra.mxu0 0.0
      %1680 = vmatprep.subr.mxu0 0.0
      %1681 = vmatpush1.msra.mxu0 0.0
      %1682 = vmatprep.subr.mxu0 0.0
      %1683 = vmatpush1.msra.mxu0 0.0
      %1684 = vmatprep.subr.mxu0 0.0
      %1685 = vmatpush1.msra.mxu0 0.0
      %1686 = vmatprep.subr.mxu0 0.0
      %1687 = vmatpush1.msra.mxu0 0.0
      %1688 = vmatprep.subr.mxu0 0.0
      %1689 = vmatpush1.msra.mxu0 0.0
      %1690 = vmatprep.subr.mxu0 0.0
      %1691 = vmatpush1.msra.mxu0 0.0
      %1692 = vmatprep.subr.mxu0 0.0
      %1693 = vmatpush1.msra.mxu0 0.0
      %1694 = vmatprep.subr.mxu0 0.0
      %1695 = vmatpush1.msra.mxu0 0.0
      %1696 = vmatprep.subr.mxu0 0.0
      %1697 = vmatpush1.msra.mxu0 0.0
      %1698 = vmatprep.subr.mxu0 0.0
      %1699 = vmatpush1.msra.mxu0 0.0
      %1700 = vmatprep.subr.mxu0 0.0
      %1701 = vmatpush1.msra.mxu0 0.0
      %1702 = vmatprep.subr.mxu0 0.0
      %1703 = vmatpush1.msra.mxu0 0.0
      %1704 = vmatprep.subr.mxu0 0.0
      %1705 = vmatpush1.msra.mxu0 0.0
      %1706 = vmatprep.subr.mxu0 %v1671
      %1707 = vmatpush1.msra.mxu0 %v1670
      %1708 = vmatprep.subr.mxu0 %v1669
      %1709 = vmatpush1.msra.mxu0 %v1668
      %1710 = vmatprep.subr.mxu0 0.0
      %1711 = vmatpush2.msra.mxu0 0.0
      %1712 = vmatprep.subr.mxu0 0.0
      %1713 = vmatpush2.msra.mxu0 0.0
      %1714 = vmatprep.subr.mxu0 0.0
      %1715 = vmatpush2.msra.mxu0 0.0
      %1716 = vmatprep.subr.mxu0 0.0
      %1717 = vmatpush2.msra.mxu0 0.0
      %1718 = vmatprep.subr.mxu0 0.0
      %1719 = vmatpush2.msra.mxu0 0.0
      %1720 = vmatprep.subr.mxu0 0.0
      %1721 = vmatpush2.msra.mxu0 0.0
      %1722 = vmatprep.subr.mxu0 0.0
      %1723 = vmatpush2.msra.mxu0 0.0
      %1724 = vmatprep.subr.mxu0 0.0
      %1725 = vmatpush2.msra.mxu0 0.0
      %1726 = vmatprep.subr.mxu0 0.0
      %1727 = vmatpush2.msra.mxu0 0.0
      %1728 = vmatprep.subr.mxu0 0.0
      %1729 = vmatpush2.msra.mxu0 0.0
      %1730 = vmatprep.subr.mxu0 0.0
      %1731 = vmatpush2.msra.mxu0 0.0
      %1732 = vmatprep.subr.mxu0 0.0
      %1733 = vmatpush2.msra.mxu0 0.0
      %1734 = vmatprep.subr.mxu0 0.0
      %1735 = vmatpush2.msra.mxu0 0.0
      %1736 = vmatprep.subr.mxu0 0.0
      %1737 = vmatpush2.msra.mxu0 0.0
      %1738 = vmatprep.subr.mxu0 0.0
      %1739 = vmatpush2.msra.mxu0 0.0
      %1740 = vmatprep.subr.mxu0 0.0
      %1741 = vmatpush2.msra.mxu0 0.0
      %1742 = vmatprep.mubr.f32.mxu0 0.0
      %1743 = vmatmul.mubr.f32.gmra.mxu0 %v1676
      %v1744 = vpop.f32.mrf.mxu0
      %v1745 = vadd.f32 0.0, %v1744
      %v1746 = vpop.f32.mrf.mxu0
      %v1747 = vadd.f32 0.0, %v1746
      %1748 = vdwg.mxu0
      %1750 = vset.pattern.permute.xlu0 0
      %1751 = vperm.xlu0 %1750, %v1672
      %v1752 = vpop.permute.xlu0 %1751
      %v1754 = vmul.f32 %v1745, %v1752
      %v1755 = vmul.f32 %v1747, %v1752
      %1756 = vset.pattern.permute.xlu0 1
      %1757 = vperm.xlu0 %1756, %v1672
      %v1758 = vpop.permute.xlu0 %1757
      %v1760 = vadd.f32 %v1754, %v1758
      %v1761 = vadd.f32 %v1755, %v1758
      %v1763 = vadd.f32 %v1760, %v306
      %v1764 = vadd.f32 %v1761, %v312
      %v1767 = vcombine.low %v1763, %v1764
      %1769 = vst [vmem:[%s305] sm:$0xff] %v1767
      %p1770 = scmp.lt.s32.totalorder %s19, 1
      %s1771 = scalar_select %p1770, %s19, 1
      %s1772 = smul.addr %s1771, 2
      %s1773 = smul.addr %s1772, 4
      %s1774 = scalar_lea.vmem %s8, %s1773
      // Predicated region
      $region53: #{cpr_forward.1} parent=51 // pred_check
        %p1775 = pneg %p210
      $region54: #{cpr_forward.1} parent=51 // pred_check_branch
        %1777 = sbr.rel (%p1775) target = $region56
      $region55: #{cpr_forward.1} parent=51 // pred_region
        _
      $region56: #{cpr_forward.1} parent=51 // pred_fallthru
        _
    $region52: #{cpr_forward.1} parent=5 // pred_fallthru
      _
    %p1778 = scmp.le.s32.totalorder 2, %s14
    // Predicated region
    $region57: #{cpr_forward.1} parent=5 // pred_check
      %p1779 = pneg %p1778
    $region58: #{cpr_forward.1} parent=5 // pred_check_branch
      %1781 = sbr.rel (%p1779) target = $region60
    $region59: #{cpr_forward.1} parent=5 // pred_region
      %s1782 = ssub.s32 %s14, 2
      // Predicated region
      $region61: #{cpr_forward.1} parent=59 // pred_check
        %p1783 = pneg %p216
      $region62: #{cpr_forward.1} parent=59 // pred_check_branch
        %1785 = sbr.rel (%p1783) target = $region64
      $region63: #{cpr_forward.1} parent=59 // pred_region
        %p1786 = scmp.lt.s32.totalorder %s20, 1
        %s1787 = scalar_select %p1786, %s20, 1
        %s1788 = smul.addr %s1787, 2
        %s1789 = smul.addr %s1788, 4
        %s1790 = scalar_lea.vmem %s8, %s1789
      $region64: #{cpr_forward.1} parent=59 // pred_fallthru
        _
    $region60: #{cpr_forward.1} parent=5 // pred_fallthru
      _
  $region6: #{cpr_forward.1} parent=0 // loop_footer
    %s18 = sadd.s32 1, %s14
  $region7: #{cpr_forward.1} parent=0 // loop_footer_branch
    %13 = sbr.rel target = $region3
  $region8: #{cpr_forward.1} parent=0 // loop_exit
    _

</llo_original>
